<compile_context>
chip_gen: v6e
topology: v6e:2x2x1
jax: 0.10.0
libtpu: 0.0.40
codegen_flags: <defaults>
</compile_context>

<pallas_src>
import math
from functools import partial

import jax
import jax.numpy as jnp
from jax.experimental import pallas as pl
from jax.experimental.pallas import tpu as pltpu


def _self_attention_head_kernel(
    x_ref, wq_ref, bq_ref, wk_ref, bk_ref, wv_ref, bv_ref, wout_ref, bout_ref,
    o_ref,
    k_scr, v_scr, acc_scr, m_scr, l_scr, y_scr,
    *, seq_len: int, block_b: int, d_head: int, kv_chunk: int, causal: bool,
    mxu_dtype, approx_recip: bool):
  S = seq_len
  dh = d_head
  rows = block_b * S
  n_chunks = S // kv_chunk
  h = pl.program_id(1)
  inv_scale = 1.0 / math.sqrt(dh)

  x = x_ref[...]                                        # (rows, D), MXU dtype

  # Per-head projections straight from this head's weight column block; q/k/v are
  # lane-contiguous (no sub-128-lane slicing of a fused qkv tensor).
  q = (jnp.dot(x, wq_ref[...], preferred_element_type=jnp.float32)
       + bq_ref[...].astype(jnp.float32)) * inv_scale   # scale folded into q once
  k = (jnp.dot(x, wk_ref[...], preferred_element_type=jnp.float32)
       + bk_ref[...].astype(jnp.float32))
  v = (jnp.dot(x, wv_ref[...], preferred_element_type=jnp.float32)
       + bv_ref[...].astype(jnp.float32))

  q3 = q.reshape(block_b, S, dh).astype(mxu_dtype)
  k_scr[...] = k.reshape(block_b, S, dh).astype(mxu_dtype)
  v_scr[...] = v.reshape(block_b, S, dh).astype(mxu_dtype)

  # Online-softmax state for this head.
  m_scr[...] = jnp.full_like(m_scr, -jnp.inf)
  l_scr[...] = jnp.zeros_like(l_scr)
  acc_scr[...] = jnp.zeros_like(acc_scr)

  if causal:
    row_ids = jax.lax.broadcasted_iota(jnp.int32, (S, kv_chunk), 0)
    col_ids = jax.lax.broadcasted_iota(jnp.int32, (S, kv_chunk), 1)

  @pl.loop(0, n_chunks)
  def _kv_step(c):
    c0 = pl.multiple_of(c * kv_chunk, kv_chunk)
    kc = k_scr[:, pl.ds(c0, kv_chunk), :]               # (block_b, C, dh)
    vc = v_scr[:, pl.ds(c0, kv_chunk), :]

    s = jnp.einsum('bqd,bkd->bqk', q3, kc,
                   preferred_element_type=jnp.float32)  # (block_b, S, C) f32
    if causal:
      # Additive mask with a large finite negative (robust if a padding mask is later
      # added); masked-only chunk contributions are exactly zeroed by the alpha rescale
      # once a real score dominates the running max.
      bias = jnp.where(col_ids + c0 > row_ids,
                       jnp.float32(-1e30), jnp.float32(0.0))
      s = s + bias[None, :, :]

    m_prev = m_scr[...]
    m_new = jnp.maximum(m_prev, jnp.max(s, axis=-1, keepdims=True))
    alpha = jnp.exp(m_prev - m_new)
    p = jnp.exp(s - m_new)                              # f32 (v5e has no bf16 EUP)
    l_scr[...] = alpha * l_scr[...] + jnp.sum(p, axis=-1, keepdims=True)
    acc_scr[...] = alpha * acc_scr[...] + jnp.einsum(
        'bqk,bkd->bqd', p.astype(mxu_dtype), vc,
        preferred_element_type=jnp.float32)
    m_scr[...] = m_new

  # Deferred normalization on the small (rows, dh) head output.
  if approx_recip:
    o_h = acc_scr[...] * pl.reciprocal(l_scr[...], approx=True)
  else:
    o_h = acc_scr[...] / l_scr[...]
  o2 = o_h.reshape(rows, dh).astype(mxu_dtype)

  # This head's contribution to the out-projection, accumulated across the head axis.
  partial_y = jnp.dot(o2, wout_ref[...], preferred_element_type=jnp.float32)  # (rows, D)

  @pl.when(h == 0)
  def _init():
    y_scr[...] = jnp.zeros_like(y_scr)

  y_scr[...] += partial_y

  @pl.when(h == pl.num_programs(1) - 1)
  def _emit():
    o_ref[...] = (y_scr[...] + bout_ref[...].astype(jnp.float32)).astype(o_ref.dtype)


def _vmem_capacity_bytes() -> int:
  try:
    return int(pltpu.get_tpu_info().vmem_capacity_bytes)
  except Exception:
    return 64 * 1024 * 1024        # conservative default (v7x per-core VMEM)


def _pick_kv_chunk(S: int, max_chunk: int = 512) -> int:
  """Largest divisor of S that is a multiple of 8 and <= max_chunk; S itself if none."""
  if S <= max_chunk:
    return S
  best = S
  for c in range(8, max_chunk + 1, 8):
    if S % c == 0:
      best = c
  return best


def _step_vmem_bytes(block_b, S, D, dh, kv_chunk, mxu_bytes, out_bytes) -> int:
  """Rough per-grid-step VMEM footprint (lane padding to 128 included)."""
  rows = block_b * S
  lane = 128
  pdh = max(dh, lane)
  b = 0
  b += 2 * rows * D * mxu_bytes             # x block (double-buffered)
  b += 2 * rows * D * out_bytes             # output block (double-buffered)
  b += 2 * 4 * D * pdh * mxu_bytes          # per-head W_q/W_k/W_v/W_out blocks
  b += rows * D * 4                         # cross-head f32 output accumulator
  b += rows * D * 4                         # out-proj partial (f32 value)
  b += 2 * rows * pdh * mxu_bytes           # K/V scratch
  b += 4 * rows * pdh * 4                   # q/k/v f32 intermediates + softmax acc
  b += 2 * rows * lane * 4                  # m / l scratch (lane padded)
  b += 2 * rows * max(kv_chunk, lane) * 4   # score + p tiles
  return b


def _pick_block_b(B, S, est_fn, vmem_budget) -> int:
  divisors = [c for c in range(1, B + 1) if B % c == 0]
  # (rows, D) block: rows = c*S must be a multiple of 8 unless it spans the full axis.
  valid = [c for c in divisors if (c * S) % 8 == 0 or c == B]
  # Keep >= 2 batch grid steps when possible so the "parallel" axis can be split across
  # both v7x TensorCores.
  pref = [c for c in valid if c <= B // 2] or valid
  fitting = [c for c in pref if est_fn(c) <= vmem_budget]
  return max(fitting) if fitting else min(pref)


def self_attention(x, w_in, b_in, w_out, b_out, *, n_heads: int,
                   causal_mask: bool = False, mxu_dtype=jnp.bfloat16,
                   block_b=None, kv_chunk=None):
  """Forward pass of SelfAttention (in_proj_bias / out_proj_bias assumed present).

  x: (B, S, D); w_in: (D, 3D) (= in_proj.weight.T); b_in: (3D,);
  w_out: (D, D) (= out_proj.weight.T); b_out: (D,).

  mxu_dtype: dtype of the matmul operands (default bf16: full-rate MXU, half the
  HBM/VMEM traffic).  Accumulation and softmax math stay f32; output keeps x.dtype.
  """
  B, S, D = x.shape
  assert D % n_heads == 0
  dh = D // n_heads
  out_dtype = x.dtype
  mxu_dtype = jnp.dtype(mxu_dtype)
  approx_recip = mxu_dtype != jnp.dtype(jnp.float32)

  if kv_chunk is None:
    kv_chunk = _pick_kv_chunk(S)
  assert S % kv_chunk == 0 and (kv_chunk % 8 == 0 or kv_chunk == S)

  vmem_cap = _vmem_capacity_bytes()
  est = lambda c: _step_vmem_bytes(c, S, D, dh, kv_chunk, mxu_dtype.itemsize,
                                   jnp.dtype(out_dtype).itemsize)
  if block_b is None:
    block_b = _pick_block_b(B, S, est, vmem_budget=vmem_cap // 2)
  assert B % block_b == 0
  assert (block_b * S) % 8 == 0 or block_b == B, "rows must satisfy sublane constraint"
  rows = block_b * S
  vmem_limit = int(vmem_cap * 0.85)

  # Per-head weight layout (plain JAX, outside the kernel).  The last two dims of every
  # blocked array are full dims, so all BlockSpecs satisfy the (8, 128) rule for any
  # d_head.
  w_q, w_k, w_v = (w_in[:, i * D:(i + 1) * D] for i in range(3))

  def head_cols(w):                                      # (D, D) -> (H, D, dh)
    return w.reshape(D, n_heads, dh).transpose(1, 0, 2).astype(mxu_dtype)

  def head_bias(b):                                      # (D,) -> (H, 1, dh), f32
    return b.reshape(n_heads, 1, dh).astype(jnp.float32)

  wq_h, wk_h, wv_h = head_cols(w_q), head_cols(w_k), head_cols(w_v)
  bq_h, bk_h, bv_h = (head_bias(b_in[i * D:(i + 1) * D]) for i in range(3))
  wout_h = w_out.reshape(n_heads, dh, D).astype(mxu_dtype)   # per-head row blocks
  bout2 = b_out.reshape(1, D).astype(jnp.float32)

  x2 = x.reshape(B * S, D).astype(mxu_dtype)

  kernel = partial(_self_attention_head_kernel,
                   seq_len=S, block_b=block_b, d_head=dh, kv_chunk=kv_chunk,
                   causal=causal_mask, mxu_dtype=mxu_dtype,
                   approx_recip=approx_recip)

  def head_spec(shape):
    return pl.BlockSpec(shape, lambda i, h: (h, 0, 0))

  out = pl.pallas_call(
      kernel,
      out_shape=jax.ShapeDtypeStruct((B * S, D), out_dtype),
      grid_spec=pltpu.PrefetchScalarGridSpec(
          num_scalar_prefetch=0,
          grid=(B // block_b, n_heads),
          in_specs=[
              pl.BlockSpec((rows, D), lambda i, h: (i, 0)),   # x rows for this block
              head_spec((None, D, dh)),                       # W_q head block
              head_spec((None, 1, dh)),                       # b_q head block
              head_spec((None, D, dh)),                       # W_k
              head_spec((None, 1, dh)),                       # b_k
              head_spec((None, D, dh)),                       # W_v
              head_spec((None, 1, dh)),                       # b_v
              head_spec((None, dh, D)),                       # W_out head (row) block
              pl.BlockSpec((1, D), lambda i, h: (0, 0)),      # b_out
          ],
          out_specs=pl.BlockSpec((rows, D), lambda i, h: (i, 0)),
          scratch_shapes=[
              pltpu.VMEM((block_b, S, dh), mxu_dtype),        # K (current head)
              pltpu.VMEM((block_b, S, dh), mxu_dtype),        # V (current head)
              pltpu.VMEM((block_b, S, dh), jnp.float32),      # online-softmax acc
              pltpu.VMEM((block_b, S, 1), jnp.float32),       # running max m
              pltpu.VMEM((block_b, S, 1), jnp.float32),       # running denom l
              pltpu.VMEM((rows, D), jnp.float32),             # cross-head output accum
          ]),
      compiler_params=pltpu.CompilerParams(
          dimension_semantics=("parallel", "arbitrary"),
          vmem_limit_bytes=vmem_limit),
  )(x2, wq_h, bq_h, wk_h, bk_h, wv_h, bv_h, wout_h, bout2)

  return out.reshape(B, S, D)


def _reference(x, w_in, b_in, w_out, b_out, n_heads, causal_mask=False):
  B, S, D = x.shape
  dh = D // n_heads
  qkv = x @ w_in + b_in
  q, k, v = jnp.split(qkv, 3, axis=-1)
  q = q.reshape(B, S, n_heads, dh).transpose(0, 2, 1, 3)
  k = k.reshape(B, S, n_heads, dh).transpose(0, 2, 1, 3)
  v = v.reshape(B, S, n_heads, dh).transpose(0, 2, 1, 3)
  w = jnp.einsum("bhqd,bhkd->bhqk", q, k)
  if causal_mask:
    mask = jnp.triu(jnp.ones((S, S), dtype=bool), 1)
    w = jnp.where(mask, -jnp.inf, w)
  w = w / math.sqrt(dh)
  w = jax.nn.softmax(w, axis=-1)
  o = jnp.einsum("bhqk,bhkd->bhqd", w, v)
  o = o.transpose(0, 2, 1, 3).reshape(B, S, D)
  return o @ w_out + b_out


if __name__ == "__main__":
  B, S, D, H = 2, 8, 32, 4  # batch, seq, d_embed, n_heads

  key = jax.random.PRNGKey(0)
  kx, k1, k2, k3, k4 = jax.random.split(key, 5)

  x = jax.random.normal(kx, (B, S, D), dtype=jnp.float32)
  bound = 1.0 / math.sqrt(D)
  w_in = jax.random.uniform(k1, (D, 3 * D), jnp.float32, -bound, bound)
  b_in = jax.random.uniform(k2, (3 * D,), jnp.float32, -bound, bound)
  w_out = jax.random.uniform(k3, (D, D), jnp.float32, -bound, bound)
  b_out = jax.random.uniform(k4, (D,), jnp.float32, -bound, bound)

  # Exact-operand (f32 MXU) path, causal and non-causal.
  for causal in (False, True):
    out = jax.block_until_ready(
        self_attention(x, w_in, b_in, w_out, b_out, n_heads=H,
                       causal_mask=causal, mxu_dtype=jnp.float32))
    ref = _reference(x, w_in, b_in, w_out, b_out, H, causal_mask=causal)
    err = jnp.max(jnp.abs(out - ref))
    assert jnp.allclose(out, ref, atol=5e-3, rtol=5e-3), (
        f"f32 mismatch (causal={causal}): {err}")

  # Default bf16-MXU path (f32 accumulation / f32 softmax), causal.
  out_bf16 = jax.block_until_ready(
      self_attention(x, w_in, b_in, w_out, b_out, n_heads=H, causal_mask=True))
  ref_c = _reference(x, w_in, b_in, w_out, b_out, H, causal_mask=True)
  assert out_bf16.dtype == x.dtype
  err = jnp.max(jnp.abs(out_bf16 - ref_c))
  assert jnp.allclose(out_bf16, ref_c, atol=5e-2, rtol=5e-2), f"bf16 mismatch: {err}"

  # Flash path: multiple kv chunks exercise the online-softmax loop + per-chunk mask.
  S2 = 64
  x2 = jax.random.normal(kx, (B, S2, D), dtype=jnp.float32)
  for causal in (False, True):
    out2 = jax.block_until_ready(
        self_attention(x2, w_in, b_in, w_out, b_out, n_heads=H,
                       causal_mask=causal, mxu_dtype=jnp.float32, kv_chunk=16))
    ref2 = _reference(x2, w_in, b_in, w_out, b_out, H, causal_mask=causal)
    err = jnp.max(jnp.abs(out2 - ref2))
    assert jnp.allclose(out2, ref2, atol=5e-3, rtol=5e-3), (
        f"flash mismatch (causal={causal}): {err}")

  print("KERNEL_OK")
</pallas_src>

<mosaic_0001>
module attributes {stable_mosaic.version = 11 : i64} {
  func.func @_self_attention_head_kernel(%arg0: i32, %arg1: i32, %arg2: memref<8x32xf32, #tpu.memory_space<vmem>>, %arg3: memref<1x32x8xf32, #tpu.memory_space<vmem>>, %arg4: memref<1x1x8xf32, #tpu.memory_space<vmem>>, %arg5: memref<1x32x8xf32, #tpu.memory_space<vmem>>, %arg6: memref<1x1x8xf32, #tpu.memory_space<vmem>>, %arg7: memref<1x32x8xf32, #tpu.memory_space<vmem>>, %arg8: memref<1x1x8xf32, #tpu.memory_space<vmem>>, %arg9: memref<1x8x32xf32, #tpu.memory_space<vmem>>, %arg10: memref<1x32xf32, #tpu.memory_space<vmem>>, %arg11: memref<8x32xf32, #tpu.memory_space<vmem>>, %arg12: memref<1x8x8xf32, #tpu.memory_space<vmem>>, %arg13: memref<1x8x8xf32, #tpu.memory_space<vmem>>, %arg14: memref<1x8x8xf32, #tpu.memory_space<vmem>>, %arg15: memref<1x8x1xf32, #tpu.memory_space<vmem>>, %arg16: memref<1x8x1xf32, #tpu.memory_space<vmem>>, %arg17: memref<8x32xf32, #tpu.memory_space<vmem>>) attributes {dimension_semantics = [#tpu.dimension_semantics<parallel>, #tpu.dimension_semantics<arbitrary>], iteration_bounds = array<i64: 2, 4>, scalar_prefetch = 0 : i64, scratch_operands = 6 : i64, tpu.core_type = #tpu.core_type<tc>, window_params = [{transform_indices = @transform_0, window_bounds = array<i64: 8, 32>}, {transform_indices = @transform_1, window_bounds = array<i64: 1, 32, 8>}, {transform_indices = @transform_2, window_bounds = array<i64: 1, 1, 8>}, {transform_indices = @transform_3, window_bounds = array<i64: 1, 32, 8>}, {transform_indices = @transform_4, window_bounds = array<i64: 1, 1, 8>}, {transform_indices = @transform_5, window_bounds = array<i64: 1, 32, 8>}, {transform_indices = @transform_6, window_bounds = array<i64: 1, 1, 8>}, {transform_indices = @transform_7, window_bounds = array<i64: 1, 8, 32>}, {pipeline_mode = #tpu.pipeline_mode<synchronous>, transform_indices = @transform_8, window_bounds = array<i64: 1, 32>}, {transform_indices = @transform_9, window_bounds = array<i64: 8, 32>}]} {
    %c0 = arith.constant 0 : index
    %c0_0 = arith.constant 0 : index
    %0 = vector.load %arg2[%c0, %c0_0] : memref<8x32xf32, #tpu.memory_space<vmem>>, vector<8x32xf32>
    %c0_1 = arith.constant 0 : index
    %c0_2 = arith.constant 0 : index
    %c0_3 = arith.constant 0 : index
    %1 = vector.load %arg3[%c0_1, %c0_2, %c0_3] : memref<1x32x8xf32, #tpu.memory_space<vmem>>, vector<1x32x8xf32>
    %2 = vector.shape_cast %1 : vector<1x32x8xf32> to vector<32x8xf32>
    %cst = arith.constant dense<0.000000e+00> : vector<8x8xf32>
    %3 = tpu.matmul %0, %2, %cst {dimension_numbers = #tpu.dot_dimension_numbers<[1], [0], [0], [1], [0, 0, 1, 1], [], []>} : vector<8x32xf32>, vector<32x8xf32>, vector<8x8xf32> -> vector<8x8xf32>
    %c0_4 = arith.constant 0 : index
    %c0_5 = arith.constant 0 : index
    %c0_6 = arith.constant 0 : index
    %4 = vector.load %arg4[%c0_4, %c0_5, %c0_6] : memref<1x1x8xf32, #tpu.memory_space<vmem>>, vector<1x1x8xf32>
    %5 = vector.shape_cast %4 : vector<1x1x8xf32> to vector<1x8xf32>
    %6 = vector.broadcast %5 : vector<1x8xf32> to vector<8x8xf32>
    %7 = arith.addf %3, %6 : vector<8x8xf32>
    %cst_7 = arith.constant 0.353553385 : f32
    %8 = vector.broadcast %cst_7 : f32 to vector<8x8xf32>
    %9 = arith.mulf %7, %8 : vector<8x8xf32>
    %c0_8 = arith.constant 0 : index
    %c0_9 = arith.constant 0 : index
    %c0_10 = arith.constant 0 : index
    %10 = vector.load %arg5[%c0_8, %c0_9, %c0_10] : memref<1x32x8xf32, #tpu.memory_space<vmem>>, vector<1x32x8xf32>
    %11 = vector.shape_cast %10 : vector<1x32x8xf32> to vector<32x8xf32>
    %cst_11 = arith.constant dense<0.000000e+00> : vector<8x8xf32>
    %12 = tpu.matmul %0, %11, %cst_11 {dimension_numbers = #tpu.dot_dimension_numbers<[1], [0], [0], [1], [0, 0, 1, 1], [], []>} : vector<8x32xf32>, vector<32x8xf32>, vector<8x8xf32> -> vector<8x8xf32>
    %c0_12 = arith.constant 0 : index
    %c0_13 = arith.constant 0 : index
    %c0_14 = arith.constant 0 : index
    %13 = vector.load %arg6[%c0_12, %c0_13, %c0_14] : memref<1x1x8xf32, #tpu.memory_space<vmem>>, vector<1x1x8xf32>
    %14 = vector.shape_cast %13 : vector<1x1x8xf32> to vector<1x8xf32>
    %15 = vector.broadcast %14 : vector<1x8xf32> to vector<8x8xf32>
    %16 = arith.addf %12, %15 : vector<8x8xf32>
    %c0_15 = arith.constant 0 : index
    %c0_16 = arith.constant 0 : index
    %c0_17 = arith.constant 0 : index
    %17 = vector.load %arg7[%c0_15, %c0_16, %c0_17] : memref<1x32x8xf32, #tpu.memory_space<vmem>>, vector<1x32x8xf32>
    %18 = vector.shape_cast %17 : vector<1x32x8xf32> to vector<32x8xf32>
    %cst_18 = arith.constant dense<0.000000e+00> : vector<8x8xf32>
    %19 = tpu.matmul %0, %18, %cst_18 {dimension_numbers = #tpu.dot_dimension_numbers<[1], [0], [0], [1], [0, 0, 1, 1], [], []>} : vector<8x32xf32>, vector<32x8xf32>, vector<8x8xf32> -> vector<8x8xf32>
    %c0_19 = arith.constant 0 : index
    %c0_20 = arith.constant 0 : index
    %c0_21 = arith.constant 0 : index
    %20 = vector.load %arg8[%c0_19, %c0_20, %c0_21] : memref<1x1x8xf32, #tpu.memory_space<vmem>>, vector<1x1x8xf32>
    %21 = vector.shape_cast %20 : vector<1x1x8xf32> to vector<1x8xf32>
    %22 = vector.broadcast %21 : vector<1x8xf32> to vector<8x8xf32>
    %23 = arith.addf %19, %22 : vector<8x8xf32>
    %24 = vector.shape_cast %9 : vector<8x8xf32> to vector<1x8x8xf32>
    %25 = vector.shape_cast %16 : vector<8x8xf32> to vector<1x8x8xf32>
    %c0_22 = arith.constant 0 : index
    %c0_23 = arith.constant 0 : index
    %c0_24 = arith.constant 0 : index
    %26 = vector.load %arg12[%c0_22, %c0_23, %c0_24] : memref<1x8x8xf32, #tpu.memory_space<vmem>>, vector<1x8x8xf32>
    tpu.vector_store %arg12[%c0_22, %c0_23, %c0_24], %25 {strides = array<i32>} : memref<1x8x8xf32, #tpu.memory_space<vmem>>, vector<1x8x8xf32>,
    %27 = vector.shape_cast %23 : vector<8x8xf32> to vector<1x8x8xf32>
    %c0_25 = arith.constant 0 : index
    %c0_26 = arith.constant 0 : index
    %c0_27 = arith.constant 0 : index
    %28 = vector.load %arg13[%c0_25, %c0_26, %c0_27] : memref<1x8x8xf32, #tpu.memory_space<vmem>>, vector<1x8x8xf32>
    tpu.vector_store %arg13[%c0_25, %c0_26, %c0_27], %27 {strides = array<i32>} : memref<1x8x8xf32, #tpu.memory_space<vmem>>, vector<1x8x8xf32>,
    %cst_28 = arith.constant 0xFF800000 : f32
    %29 = vector.broadcast %cst_28 : f32 to vector<1x8x1xf32>
    %c0_29 = arith.constant 0 : index
    %c0_30 = arith.constant 0 : index
    %c0_31 = arith.constant 0 : index
    %30 = vector.load %arg15[%c0_29, %c0_30, %c0_31] : memref<1x8x1xf32, #tpu.memory_space<vmem>>, vector<1x8x1xf32>
    tpu.vector_store %arg15[%c0_29, %c0_30, %c0_31], %29 {strides = array<i32>} : memref<1x8x1xf32, #tpu.memory_space<vmem>>, vector<1x8x1xf32>,
    %cst_32 = arith.constant 0.000000e+00 : f32
    %31 = vector.broadcast %cst_32 : f32 to vector<1x8x1xf32>
    %c0_33 = arith.constant 0 : index
    %c0_34 = arith.constant 0 : index
    %c0_35 = arith.constant 0 : index
    %32 = vector.load %arg16[%c0_33, %c0_34, %c0_35] : memref<1x8x1xf32, #tpu.memory_space<vmem>>, vector<1x8x1xf32>
    tpu.vector_store %arg16[%c0_33, %c0_34, %c0_35], %31 {strides = array<i32>} : memref<1x8x1xf32, #tpu.memory_space<vmem>>, vector<1x8x1xf32>,
    %cst_36 = arith.constant 0.000000e+00 : f32
    %33 = vector.broadcast %cst_36 : f32 to vector<1x8x8xf32>
    %c0_37 = arith.constant 0 : index
    %c0_38 = arith.constant 0 : index
    %c0_39 = arith.constant 0 : index
    %34 = vector.load %arg14[%c0_37, %c0_38, %c0_39] : memref<1x8x8xf32, #tpu.memory_space<vmem>>, vector<1x8x8xf32>
    tpu.vector_store %arg14[%c0_37, %c0_38, %c0_39], %33 {strides = array<i32>} : memref<1x8x8xf32, #tpu.memory_space<vmem>>, vector<1x8x8xf32>,
    %c0_i32 = arith.constant 0 : i32
    %c1_i32 = arith.constant 1 : i32
    %35 = arith.muli %c0_i32, %c1_i32 : i32
    %c0_i32_40 = arith.constant 0 : i32
    %36 = arith.addi %c0_i32_40, %35 : i32
    %c8_i32 = arith.constant 8 : i32
    %37 = arith.muli %36, %c8_i32 : i32
    %38 = tpu.assume_multiple %37, 8 : i32
    %c0_41 = arith.constant 0 : index
    %39 = arith.index_cast %38 : i32 to index
    %c0_42 = arith.constant 0 : index
    %40 = vector.load %arg12[%c0_41, %39, %c0_42] : memref<1x8x8xf32, #tpu.memory_space<vmem>>, vector<1x8x8xf32>
    %c0_43 = arith.constant 0 : index
    %41 = arith.index_cast %38 : i32 to index
    %c0_44 = arith.constant 0 : index
    %42 = vector.load %arg13[%c0_43, %41, %c0_44] : memref<1x8x8xf32, #tpu.memory_space<vmem>>, vector<1x8x8xf32>
    "tpu.trace_start"() <{level = 10 : i32, message = "bqd,bkd->bqk"}> : () -> ()
    %cst_45 = arith.constant dense<0.000000e+00> : vector<1x8x8xf32>
    %43 = tpu.matmul %24, %40, %cst_45 {dimension_numbers = #tpu.dot_dimension_numbers<[2], [2], [1], [1], [0, 0, 0, 1, 1, 1], [0], [0]>} : vector<1x8x8xf32>, vector<1x8x8xf32>, vector<1x8x8xf32> -> vector<1x8x8xf32>
    "tpu.trace_stop"() : () -> ()
    %c0_46 = arith.constant 0 : index
    %c0_47 = arith.constant 0 : index
    %c0_48 = arith.constant 0 : index
    %44 = vector.load %arg15[%c0_46, %c0_47, %c0_48] : memref<1x8x1xf32, #tpu.memory_space<vmem>>, vector<1x8x1xf32>
    %cst_49 = arith.constant dense<0xFF800000> : vector<1x8xf32>
    %45 = vector.multi_reduction <maximumf>, %43, %cst_49 [2] : vector<1x8x8xf32> to vector<1x8xf32>
    %46 = vector.shape_cast %45 : vector<1x8xf32> to vector<1x8x1xf32>
    %47 = arith.maximumf %44, %46 : vector<1x8x1xf32>
    %48 = arith.subf %44, %47 : vector<1x8x1xf32>
    %49 = math.exp %48 : vector<1x8x1xf32>
    %50 = vector.broadcast %47 : vector<1x8x1xf32> to vector<1x8x8xf32>
    %51 = arith.subf %43, %50 : vector<1x8x8xf32>
    %52 = math.exp %51 : vector<1x8x8xf32>
    %c0_50 = arith.constant 0 : index
    %c0_51 = arith.constant 0 : index
    %c0_52 = arith.constant 0 : index
    %53 = vector.load %arg16[%c0_50, %c0_51, %c0_52] : memref<1x8x1xf32, #tpu.memory_space<vmem>>, vector<1x8x1xf32>
    %54 = arith.mulf %49, %53 : vector<1x8x1xf32>
    %cst_53 = arith.constant dense<0.000000e+00> : vector<1x8xf32>
    %55 = vector.multi_reduction <add>, %52, %cst_53 [2] : vector<1x8x8xf32> to vector<1x8xf32>
    %56 = vector.shape_cast %55 : vector<1x8xf32> to vector<1x8x1xf32>
    %57 = arith.addf %54, %56 : vector<1x8x1xf32>
    %c0_54 = arith.constant 0 : index
    %c0_55 = arith.constant 0 : index
    %c0_56 = arith.constant 0 : index
    %58 = vector.load %arg16[%c0_54, %c0_55, %c0_56] : memref<1x8x1xf32, #tpu.memory_space<vmem>>, vector<1x8x1xf32>
    tpu.vector_store %arg16[%c0_54, %c0_55, %c0_56], %57 {strides = array<i32>} : memref<1x8x1xf32, #tpu.memory_space<vmem>>, vector<1x8x1xf32>,
    %c0_57 = arith.constant 0 : index
    %c0_58 = arith.constant 0 : index
    %c0_59 = arith.constant 0 : index
    %59 = vector.load %arg14[%c0_57, %c0_58, %c0_59] : memref<1x8x8xf32, #tpu.memory_space<vmem>>, vector<1x8x8xf32>
    %60 = vector.broadcast %49 : vector<1x8x1xf32> to vector<1x8x8xf32>
    %61 = arith.mulf %60, %59 : vector<1x8x8xf32>
    "tpu.trace_start"() <{level = 10 : i32, message = "bqk,bkd->bqd"}> : () -> ()
    %cst_60 = arith.constant dense<0.000000e+00> : vector<1x8x8xf32>
    %62 = tpu.matmul %52, %42, %cst_60 {dimension_numbers = #tpu.dot_dimension_numbers<[2], [1], [1], [2], [0, 0, 0, 1, 1, 2], [0], [0]>} : vector<1x8x8xf32>, vector<1x8x8xf32>, vector<1x8x8xf32> -> vector<1x8x8xf32>
    "tpu.trace_stop"() : () -> ()
    %63 = arith.addf %61, %62 : vector<1x8x8xf32>
    %c0_61 = arith.constant 0 : index
    %c0_62 = arith.constant 0 : index
    %c0_63 = arith.constant 0 : index
    %64 = vector.load %arg14[%c0_61, %c0_62, %c0_63] : memref<1x8x8xf32, #tpu.memory_space<vmem>>, vector<1x8x8xf32>
    tpu.vector_store %arg14[%c0_61, %c0_62, %c0_63], %63 {strides = array<i32>} : memref<1x8x8xf32, #tpu.memory_space<vmem>>, vector<1x8x8xf32>,
    %c0_64 = arith.constant 0 : index
    %c0_65 = arith.constant 0 : index
    %c0_66 = arith.constant 0 : index
    %65 = vector.load %arg15[%c0_64, %c0_65, %c0_66] : memref<1x8x1xf32, #tpu.memory_space<vmem>>, vector<1x8x1xf32>
    tpu.vector_store %arg15[%c0_64, %c0_65, %c0_66], %47 {strides = array<i32>} : memref<1x8x1xf32, #tpu.memory_space<vmem>>, vector<1x8x1xf32>,
    %c1_i32_67 = arith.constant 1 : i32
    %c0_68 = arith.constant 0 : index
    %c0_69 = arith.constant 0 : index
    %c0_70 = arith.constant 0 : index
    %66 = vector.load %arg14[%c0_68, %c0_69, %c0_70] : memref<1x8x8xf32, #tpu.memory_space<vmem>>, vector<1x8x8xf32>
    %c0_71 = arith.constant 0 : index
    %c0_72 = arith.constant 0 : index
    %c0_73 = arith.constant 0 : index
    %67 = vector.load %arg16[%c0_71, %c0_72, %c0_73] : memref<1x8x1xf32, #tpu.memory_space<vmem>>, vector<1x8x1xf32>
    %68 = vector.broadcast %67 : vector<1x8x1xf32> to vector<1x8x8xf32>
    %69 = arith.divf %66, %68 : vector<1x8x8xf32>
    %70 = vector.shape_cast %69 : vector<1x8x8xf32> to vector<8x8xf32>
    %c0_74 = arith.constant 0 : index
    %c0_75 = arith.constant 0 : index
    %c0_76 = arith.constant 0 : index
    %71 = vector.load %arg9[%c0_74, %c0_75, %c0_76] : memref<1x8x32xf32, #tpu.memory_space<vmem>>, vector<1x8x32xf32>
    %72 = vector.shape_cast %71 : vector<1x8x32xf32> to vector<8x32xf32>
    %cst_77 = arith.constant dense<0.000000e+00> : vector<8x32xf32>
    %73 = tpu.matmul %70, %72, %cst_77 {dimension_numbers = #tpu.dot_dimension_numbers<[1], [0], [0], [1], [0, 0, 1, 1], [], []>} : vector<8x8xf32>, vector<8x32xf32>, vector<8x32xf32> -> vector<8x32xf32>
    %c0_i32_78 = arith.constant 0 : i32
    %74 = arith.cmpi eq, %arg1, %c0_i32_78 : i32
    %75 = arith.extui %74 : i1 to i32
    %c0_i32_79 = arith.constant 0 : i32
    %76 = arith.cmpi ne, %75, %c0_i32_79 : i32
    scf.if %76 {
      %cst_85 = arith.constant 0.000000e+00 : f32
      %83 = vector.broadcast %cst_85 : f32 to vector<8x32xf32>
      %c0_86 = arith.constant 0 : index
      %c0_87 = arith.constant 0 : index
      %84 = vector.load %arg17[%c0_86, %c0_87] : memref<8x32xf32, #tpu.memory_space<vmem>>, vector<8x32xf32>
      tpu.vector_store %arg17[%c0_86, %c0_87], %83 {strides = array<i32>} : memref<8x32xf32, #tpu.memory_space<vmem>>, vector<8x32xf32>,
    } else {
    }
    %c0_80 = arith.constant 0 : index
    %c0_81 = arith.constant 0 : index
    %77 = vector.load %arg17[%c0_80, %c0_81] : memref<8x32xf32, #tpu.memory_space<vmem>>, vector<8x32xf32>
    %78 = arith.addf %77, %73 : vector<8x32xf32>
    %c0_82 = arith.constant 0 : index
    %c0_83 = arith.constant 0 : index
    %79 = vector.load %arg17[%c0_82, %c0_83] : memref<8x32xf32, #tpu.memory_space<vmem>>, vector<8x32xf32>
    tpu.vector_store %arg17[%c0_82, %c0_83], %78 {strides = array<i32>} : memref<8x32xf32, #tpu.memory_space<vmem>>, vector<8x32xf32>,
    %c3_i32 = arith.constant 3 : i32
    %80 = arith.cmpi eq, %arg1, %c3_i32 : i32
    %81 = arith.extui %80 : i1 to i32
    %c0_i32_84 = arith.constant 0 : i32
    %82 = arith.cmpi ne, %81, %c0_i32_84 : i32
    scf.if %82 {
      %c0_85 = arith.constant 0 : index
      %c0_86 = arith.constant 0 : index
      %83 = vector.load %arg17[%c0_85, %c0_86] : memref<8x32xf32, #tpu.memory_space<vmem>>, vector<8x32xf32>
      %c0_87 = arith.constant 0 : index
      %c0_88 = arith.constant 0 : index
      %84 = vector.load %arg10[%c0_87, %c0_88] : memref<1x32xf32, #tpu.memory_space<vmem>>, vector<1x32xf32>
      %85 = vector.broadcast %84 : vector<1x32xf32> to vector<8x32xf32>
      %86 = arith.addf %83, %85 : vector<8x32xf32>
      %c0_89 = arith.constant 0 : index
      %c0_90 = arith.constant 0 : index
      %87 = vector.load %arg11[%c0_89, %c0_90] : memref<8x32xf32, #tpu.memory_space<vmem>>, vector<8x32xf32>
      tpu.vector_store %arg11[%c0_89, %c0_90], %86 {strides = array<i32>} : memref<8x32xf32, #tpu.memory_space<vmem>>, vector<8x32xf32>,
    } else {
    }
    return
  }
  func.func @transform_0(%arg0: i32, %arg1: i32) -> (i32, i32) {
    %c0_i32 = arith.constant 0 : i32
    %c0_i32_0 = arith.constant 0 : i32
    return %arg0, %c0_i32 : i32, i32
  }
  func.func @transform_1(%arg0: i32, %arg1: i32) -> (i32, i32, i32) {
    %c0_i32 = arith.constant 0 : i32
    %c0_i32_0 = arith.constant 0 : i32
    %c0_i32_1 = arith.constant 0 : i32
    return %arg1, %c0_i32, %c0_i32_0 : i32, i32, i32
  }
  func.func @transform_2(%arg0: i32, %arg1: i32) -> (i32, i32, i32) {
    %c0_i32 = arith.constant 0 : i32
    %c0_i32_0 = arith.constant 0 : i32
    %c0_i32_1 = arith.constant 0 : i32
    return %arg1, %c0_i32, %c0_i32_0 : i32, i32, i32
  }
  func.func @transform_3(%arg0: i32, %arg1: i32) -> (i32, i32, i32) {
    %c0_i32 = arith.constant 0 : i32
    %c0_i32_0 = arith.constant 0 : i32
    %c0_i32_1 = arith.constant 0 : i32
    return %arg1, %c0_i32, %c0_i32_0 : i32, i32, i32
  }
  func.func @transform_4(%arg0: i32, %arg1: i32) -> (i32, i32, i32) {
    %c0_i32 = arith.constant 0 : i32
    %c0_i32_0 = arith.constant 0 : i32
    %c0_i32_1 = arith.constant 0 : i32
    return %arg1, %c0_i32, %c0_i32_0 : i32, i32, i32
  }
  func.func @transform_5(%arg0: i32, %arg1: i32) -> (i32, i32, i32) {
    %c0_i32 = arith.constant 0 : i32
    %c0_i32_0 = arith.constant 0 : i32
    %c0_i32_1 = arith.constant 0 : i32
    return %arg1, %c0_i32, %c0_i32_0 : i32, i32, i32
  }
  func.func @transform_6(%arg0: i32, %arg1: i32) -> (i32, i32, i32) {
    %c0_i32 = arith.constant 0 : i32
    %c0_i32_0 = arith.constant 0 : i32
    %c0_i32_1 = arith.constant 0 : i32
    return %arg1, %c0_i32, %c0_i32_0 : i32, i32, i32
  }
  func.func @transform_7(%arg0: i32, %arg1: i32) -> (i32, i32, i32) {
    %c0_i32 = arith.constant 0 : i32
    %c0_i32_0 = arith.constant 0 : i32
    %c0_i32_1 = arith.constant 0 : i32
    return %arg1, %c0_i32, %c0_i32_0 : i32, i32, i32
  }
  func.func @transform_8(%arg0: i32, %arg1: i32) -> (i32, i32) {
    %c0_i32 = arith.constant 0 : i32
    %c0_i32_0 = arith.constant 0 : i32
    %c0_i32_1 = arith.constant 0 : i32
    return %c0_i32, %c0_i32_0 : i32, i32
  }
  func.func @transform_9(%arg0: i32, %arg1: i32) -> (i32, i32) {
    %c0_i32 = arith.constant 0 : i32
    %c0_i32_0 = arith.constant 0 : i32
    return %arg0, %c0_i32 : i32, i32
  }
}

</mosaic_0001>

<llo_original>
// kernel: tpu_custom_call.1
$region0: #{tpu_custom_call.1}
  #allocation0 [shape = 'u32[]', space=smem, size = 0x4, offset = 0x4, fixed_abs, tag = 'smem constant byte address 0x4 - core index']
  #allocation1 [shape = 'u32[144,128]{1,0:T(1,128)}', space=vmem, size = 0x12000, scoped, tag = 'internal scratch']
  #allocation2 [shape = 'f32[1,8,8]{2,1,0:T(8,128)}', space=vmem, size = 0x1000, scoped, tag = 'scratch operand']
  #allocation3 [shape = 'f32[1,8,8]{2,1,0:T(8,128)}', space=vmem, size = 0x1000, scoped, tag = 'scratch operand']
  #allocation4 [shape = 'f32[1,8,8]{2,1,0:T(8,128)}', space=vmem, size = 0x1000, scoped, tag = 'scratch operand']
  #allocation5 [shape = 'f32[1,8,1]{2,1,0:T(8,128)}', space=vmem, size = 0x1000, scoped, tag = 'scratch operand']
  #allocation6 [shape = 'f32[1,8,1]{2,1,0:T(8,128)}', space=vmem, size = 0x1000, scoped, tag = 'scratch operand']
  #allocation7 [shape = 'f32[8,32]{1,0:T(8,128)}', space=vmem, size = 0x1000, scoped, tag = 'scratch operand']
  %s0 = inlined_call_operand.vmem [shape: f32[16,32], index: 0, kind: input, shape index: {}]
  %s1 = inlined_call_operand.vmem [shape: f32[4,32,8], index: 1, kind: input, shape index: {}]
  %s2 = inlined_call_operand.vmem [shape: f32[4,1,8], index: 2, kind: input, shape index: {}]
  %s3 = inlined_call_operand.vmem [shape: f32[4,32,8], index: 3, kind: input, shape index: {}]
  %s4 = inlined_call_operand.vmem [shape: f32[4,1,8], index: 4, kind: input, shape index: {}]
  %s5 = inlined_call_operand.vmem [shape: f32[4,32,8], index: 5, kind: input, shape index: {}]
  %s6 = inlined_call_operand.vmem [shape: f32[4,1,8], index: 6, kind: input, shape index: {}]
  %s7 = inlined_call_operand.vmem [shape: f32[4,8,32], index: 7, kind: input, shape index: {}]
  %s8 = inlined_call_operand.vmem [shape: f32[1,32], index: 8, kind: input, shape index: {}]
  %s9 = inlined_call_operand.hbm [shape: f32[16,32], index: 9, kind: output, shape index: {}]
  %s10 = sld [smem:[#allocation0]]
  $region77: #{tpu_custom_call.1} parent=0
    _
  %s12 = ssub.s32 1, %s10
  %s13 = scalar_select 0, %s12, %s10
  $region1: #{tpu_custom_call.1} parent=0
    #allocation8 [shape = 'u8[8192]{0}', space=vmem, size = 0x2000, scoped, tag = 'output window, operand 0']
    #allocation9 [shape = 's32[2]{0}', space=sflag, size = 0x8, scoped, tag = 'scoped memory for tpu_custom_call.1']
    %14 = vsyncpa [#allocation9], 0
    %s15 = scalar_lea.sflag [#allocation9], 1
    %16 = vsyncpa %s15, 0
    loop: start=0, step=1, limit=10
    $region2: #{tpu_custom_call.1} parent=1 // loop_pre_header
      _
    $region3: #{tpu_custom_call.1} parent=1 // loop_header
      %s18 = sphi 0, %s22
      %p19 = scmp.ge.s32.totalorder %s18, 10
      %s25 = sphi 0, %s37
      %s26 = sphi 0, %s33
      %s27 = sphi 0, %s25
      %s28 = sphi 0, %s26
      %s29 = sphi 0, %s27
      %s30 = sphi 0, %s28
      %s40 = sphi 0, %s42
      %s43 = sphi 0, %s40
      %s44 = sphi 0, %s43
      %s60 = sphi 0, %s44
      %s66 = sphi 0, %s68
      %s69 = sphi 0, %s66
      %s70 = sphi 0, %s69
      %s86 = sphi 0, %s70
      %s92 = sphi 0, %s94
      %s95 = sphi 0, %s92
      %s96 = sphi 0, %s95
      %s112 = sphi 0, %s96
      %s118 = sphi 0, %s120
      %s121 = sphi 0, %s118
      %s122 = sphi 0, %s121
      %s138 = sphi 0, %s122
      %s144 = sphi 0, %s146
      %s147 = sphi 0, %s144
      %s148 = sphi 0, %s147
      %s164 = sphi 0, %s148
      %s170 = sphi 0, %s172
      %s173 = sphi 0, %s170
      %s174 = sphi 0, %s173
      %s190 = sphi 0, %s174
      %s196 = sphi 0, %s198
      %s199 = sphi 0, %s196
      %s200 = sphi 0, %s199
      %s216 = sphi 0, %s200
      %s222 = sphi 0, %s224
      %s225 = sphi 0, %s222
      %s226 = sphi 0, %s225
      %s242 = sphi 0, %s226
      %s246 = sphi 0, %s246
      %s248 = sphi 0, %s246
      %s249 = sphi 0, %s248
      %s263 = sphi 0, %s249
      %s269 = sphi 0, %s271
      %s272 = sphi 0, %s269
      %s273 = sphi 0, %s272
      %s289 = sphi 0, %s273
    $region4: #{tpu_custom_call.1} parent=1 // loop_header_branch
      %21 = sbr.rel (%p19) target = $region8
    $region5: #{tpu_custom_call.1} parent=1 // loop_body
      %s23 = ssub.s32 %s18, 1
      %s24 = ssub.s32 %s18, 2
      %s31 = sadd.s32 1, %s26
      %p32 = scmp.ge.s32.totalorder %s31, 4
      %s33 = scalar_select %p32, 0, %s31
      %s34 = sadd.s32 1, %s25
      %s35 = scalar_select %p32, %s34, %s25
      %p36 = scmp.ge.s32.totalorder %s35, 2
      %s37 = scalar_select %p36, 0, %s35
      %s38 = ssub.s32 %s25, %s37
      %p39 = scmp.eq.s32.totalorder %s38, 0
      %s41 = sadd.s32 %s40, 1
      %s42 = scalar_select %p39, %s40, %s41
      %p45 = pneg %p39
      %p46 = scmp.eq.s32.totalorder %s18, 7
      %p47 = por %p45, %p46
      %p48 = scmp.ne.s32.totalorder %s40, %s43
      %p49 = scmp.eq.s32.totalorder %s18, 0
      %p50 = por %p48, %p49
      %p51 = scmp.ne.s32.totalorder %s40, %s43
      %p52 = scmp.eq.s32.totalorder %s23, 7
      %p53 = por %p51, %p52
      %p54 = scmp.ne.s32.totalorder %s43, %s44
      %p55 = scmp.eq.s32.totalorder %s23, 0
      %p56 = por %p54, %p55
      %p57 = scmp.ne.s32.totalorder %s43, %s44
      %p58 = scmp.eq.s32.totalorder %s24, 7
      %p59 = por %p57, %p58
      %p61 = scmp.ne.s32.totalorder %s44, %s60
      %p62 = scmp.eq.s32.totalorder %s24, 0
      %p63 = por %p61, %p62
      %s64 = ssub.s32 %s26, %s33
      %p65 = scmp.eq.s32.totalorder %s64, 0
      %s67 = sadd.s32 %s66, 1
      %s68 = scalar_select %p65, %s66, %s67
      %p71 = pneg %p65
      %p72 = scmp.eq.s32.totalorder %s18, 7
      %p73 = por %p71, %p72
      %p74 = scmp.ne.s32.totalorder %s66, %s69
      %p75 = scmp.eq.s32.totalorder %s18, 0
      %p76 = por %p74, %p75
      %p77 = scmp.ne.s32.totalorder %s66, %s69
      %p78 = scmp.eq.s32.totalorder %s23, 7
      %p79 = por %p77, %p78
      %p80 = scmp.ne.s32.totalorder %s69, %s70
      %p81 = scmp.eq.s32.totalorder %s23, 0
      %p82 = por %p80, %p81
      %p83 = scmp.ne.s32.totalorder %s69, %s70
      %p84 = scmp.eq.s32.totalorder %s24, 7
      %p85 = por %p83, %p84
      %p87 = scmp.ne.s32.totalorder %s70, %s86
      %p88 = scmp.eq.s32.totalorder %s24, 0
      %p89 = por %p87, %p88
      %s90 = ssub.s32 %s26, %s33
      %p91 = scmp.eq.s32.totalorder %s90, 0
      %s93 = sadd.s32 %s92, 1
      %s94 = scalar_select %p91, %s92, %s93
      %p97 = pneg %p91
      %p98 = scmp.eq.s32.totalorder %s18, 7
      %p99 = por %p97, %p98
      %p100 = scmp.ne.s32.totalorder %s92, %s95
      %p101 = scmp.eq.s32.totalorder %s18, 0
      %p102 = por %p100, %p101
      %p103 = scmp.ne.s32.totalorder %s92, %s95
      %p104 = scmp.eq.s32.totalorder %s23, 7
      %p105 = por %p103, %p104
      %p106 = scmp.ne.s32.totalorder %s95, %s96
      %p107 = scmp.eq.s32.totalorder %s23, 0
      %p108 = por %p106, %p107
      %p109 = scmp.ne.s32.totalorder %s95, %s96
      %p110 = scmp.eq.s32.totalorder %s24, 7
      %p111 = por %p109, %p110
      %p113 = scmp.ne.s32.totalorder %s96, %s112
      %p114 = scmp.eq.s32.totalorder %s24, 0
      %p115 = por %p113, %p114
      %s116 = ssub.s32 %s26, %s33
      %p117 = scmp.eq.s32.totalorder %s116, 0
      %s119 = sadd.s32 %s118, 1
      %s120 = scalar_select %p117, %s118, %s119
      %p123 = pneg %p117
      %p124 = scmp.eq.s32.totalorder %s18, 7
      %p125 = por %p123, %p124
      %p126 = scmp.ne.s32.totalorder %s118, %s121
      %p127 = scmp.eq.s32.totalorder %s18, 0
      %p128 = por %p126, %p127
      %p129 = scmp.ne.s32.totalorder %s118, %s121
      %p130 = scmp.eq.s32.totalorder %s23, 7
      %p131 = por %p129, %p130
      %p132 = scmp.ne.s32.totalorder %s121, %s122
      %p133 = scmp.eq.s32.totalorder %s23, 0
      %p134 = por %p132, %p133
      %p135 = scmp.ne.s32.totalorder %s121, %s122
      %p136 = scmp.eq.s32.totalorder %s24, 7
      %p137 = por %p135, %p136
      %p139 = scmp.ne.s32.totalorder %s122, %s138
      %p140 = scmp.eq.s32.totalorder %s24, 0
      %p141 = por %p139, %p140
      %s142 = ssub.s32 %s26, %s33
      %p143 = scmp.eq.s32.totalorder %s142, 0
      %s145 = sadd.s32 %s144, 1
      %s146 = scalar_select %p143, %s144, %s145
      %p149 = pneg %p143
      %p150 = scmp.eq.s32.totalorder %s18, 7
      %p151 = por %p149, %p150
      %p152 = scmp.ne.s32.totalorder %s144, %s147
      %p153 = scmp.eq.s32.totalorder %s18, 0
      %p154 = por %p152, %p153
      %p155 = scmp.ne.s32.totalorder %s144, %s147
      %p156 = scmp.eq.s32.totalorder %s23, 7
      %p157 = por %p155, %p156
      %p158 = scmp.ne.s32.totalorder %s147, %s148
      %p159 = scmp.eq.s32.totalorder %s23, 0
      %p160 = por %p158, %p159
      %p161 = scmp.ne.s32.totalorder %s147, %s148
      %p162 = scmp.eq.s32.totalorder %s24, 7
      %p163 = por %p161, %p162
      %p165 = scmp.ne.s32.totalorder %s148, %s164
      %p166 = scmp.eq.s32.totalorder %s24, 0
      %p167 = por %p165, %p166
      %s168 = ssub.s32 %s26, %s33
      %p169 = scmp.eq.s32.totalorder %s168, 0
      %s171 = sadd.s32 %s170, 1
      %s172 = scalar_select %p169, %s170, %s171
      %p175 = pneg %p169
      %p176 = scmp.eq.s32.totalorder %s18, 7
      %p177 = por %p175, %p176
      %p178 = scmp.ne.s32.totalorder %s170, %s173
      %p179 = scmp.eq.s32.totalorder %s18, 0
      %p180 = por %p178, %p179
      %p181 = scmp.ne.s32.totalorder %s170, %s173
      %p182 = scmp.eq.s32.totalorder %s23, 7
      %p183 = por %p181, %p182
      %p184 = scmp.ne.s32.totalorder %s173, %s174
      %p185 = scmp.eq.s32.totalorder %s23, 0
      %p186 = por %p184, %p185
      %p187 = scmp.ne.s32.totalorder %s173, %s174
      %p188 = scmp.eq.s32.totalorder %s24, 7
      %p189 = por %p187, %p188
      %p191 = scmp.ne.s32.totalorder %s174, %s190
      %p192 = scmp.eq.s32.totalorder %s24, 0
      %p193 = por %p191, %p192
      %s194 = ssub.s32 %s26, %s33
      %p195 = scmp.eq.s32.totalorder %s194, 0
      %s197 = sadd.s32 %s196, 1
      %s198 = scalar_select %p195, %s196, %s197
      %p201 = pneg %p195
      %p202 = scmp.eq.s32.totalorder %s18, 7
      %p203 = por %p201, %p202
      %p204 = scmp.ne.s32.totalorder %s196, %s199
      %p205 = scmp.eq.s32.totalorder %s18, 0
      %p206 = por %p204, %p205
      %p207 = scmp.ne.s32.totalorder %s196, %s199
      %p208 = scmp.eq.s32.totalorder %s23, 7
      %p209 = por %p207, %p208
      %p210 = scmp.ne.s32.totalorder %s199, %s200
      %p211 = scmp.eq.s32.totalorder %s23, 0
      %p212 = por %p210, %p211
      %p213 = scmp.ne.s32.totalorder %s199, %s200
      %p214 = scmp.eq.s32.totalorder %s24, 7
      %p215 = por %p213, %p214
      %p217 = scmp.ne.s32.totalorder %s200, %s216
      %p218 = scmp.eq.s32.totalorder %s24, 0
      %p219 = por %p217, %p218
      %s220 = ssub.s32 %s26, %s33
      %p221 = scmp.eq.s32.totalorder %s220, 0
      %s223 = sadd.s32 %s222, 1
      %s224 = scalar_select %p221, %s222, %s223
      %p227 = pneg %p221
      %p228 = scmp.eq.s32.totalorder %s18, 7
      %p229 = por %p227, %p228
      %p230 = scmp.ne.s32.totalorder %s222, %s225
      %p231 = scmp.eq.s32.totalorder %s18, 0
      %p232 = por %p230, %p231
      %p233 = scmp.ne.s32.totalorder %s222, %s225
      %p234 = scmp.eq.s32.totalorder %s23, 7
      %p235 = por %p233, %p234
      %p236 = scmp.ne.s32.totalorder %s225, %s226
      %p237 = scmp.eq.s32.totalorder %s23, 0
      %p238 = por %p236, %p237
      %p239 = scmp.ne.s32.totalorder %s225, %s226
      %p240 = scmp.eq.s32.totalorder %s24, 7
      %p241 = por %p239, %p240
      %p243 = scmp.ne.s32.totalorder %s226, %s242
      %p244 = scmp.eq.s32.totalorder %s24, 0
      %p245 = por %p243, %p244
      %s247 = sadd.s32 %s246, 1
      %p250 = scmp.eq.s32.totalorder %s18, 7
      %p251 = scmp.ne.s32.totalorder %s246, %s248
      %p252 = scmp.eq.s32.totalorder %s18, 0
      %p253 = por %p251, %p252
      %p254 = scmp.ne.s32.totalorder %s246, %s248
      %p255 = scmp.eq.s32.totalorder %s23, 7
      %p256 = por %p254, %p255
      %p257 = scmp.ne.s32.totalorder %s248, %s249
      %p258 = scmp.eq.s32.totalorder %s23, 0
      %p259 = por %p257, %p258
      %p260 = scmp.ne.s32.totalorder %s248, %s249
      %p261 = scmp.eq.s32.totalorder %s24, 7
      %p262 = por %p260, %p261
      %p264 = scmp.ne.s32.totalorder %s249, %s263
      %p265 = scmp.eq.s32.totalorder %s24, 0
      %p266 = por %p264, %p265
      %s267 = ssub.s32 %s25, %s37
      %p268 = scmp.eq.s32.totalorder %s267, 0
      %s270 = sadd.s32 %s269, 1
      %s271 = scalar_select %p268, %s269, %s270
      %p274 = pneg %p268
      %p275 = scmp.eq.s32.totalorder %s18, 7
      %p276 = por %p274, %p275
      %p277 = scmp.ne.s32.totalorder %s269, %s272
      %p278 = scmp.eq.s32.totalorder %s18, 0
      %p279 = por %p277, %p278
      %p280 = scmp.ne.s32.totalorder %s269, %s272
      %p281 = scmp.eq.s32.totalorder %s23, 7
      %p282 = por %p280, %p281
      %p283 = scmp.ne.s32.totalorder %s272, %s273
      %p284 = scmp.eq.s32.totalorder %s23, 0
      %p285 = por %p283, %p284
      %p286 = scmp.ne.s32.totalorder %s272, %s273
      %p287 = scmp.eq.s32.totalorder %s24, 7
      %p288 = por %p286, %p287
      %p290 = scmp.ne.s32.totalorder %s273, %s289
      %p291 = scmp.eq.s32.totalorder %s24, 0
      %p292 = por %p290, %p291
      %p293 = scmp.le.s32.totalorder 1, %s18
      %p294 = scmp.lt.s32.totalorder %s18, 9
      %p295 = pnand %p293, %p294
      %p296 = pneg %p295
      // Predicated region
      $region9: #{tpu_custom_call.1} parent=5 // pred_check
        _
      $region10: #{tpu_custom_call.1} parent=5 // pred_check_branch
        %298 = sbr.rel (%p295) target = $region12
      $region11: #{tpu_custom_call.1} parent=5 // pred_region
        %s299 = ssub.s32 %s18, 1
        // Predicated region
        $region13: #{tpu_custom_call.1} parent=11 // pred_check
          %p300 = pneg %p259
        $region14: #{tpu_custom_call.1} parent=11 // pred_check_branch
          %302 = sbr.rel (%p300) target = $region16
        $region15: #{tpu_custom_call.1} parent=11 // pred_region
          _
        $region16: #{tpu_custom_call.1} parent=11 // pred_fallthru
          _
      $region12: #{tpu_custom_call.1} parent=5 // pred_fallthru
        _
      %p303 = scmp.lt.s32.totalorder %s18, 8
      // Predicated region
      $region17: #{tpu_custom_call.1} parent=5 // pred_check
        %p304 = pneg %p303
      $region18: #{tpu_custom_call.1} parent=5 // pred_check_branch
        %306 = sbr.rel (%p304) target = $region20
      $region19: #{tpu_custom_call.1} parent=5 // pred_region
        // Predicated region
        $region21: #{tpu_custom_call.1} parent=19 // pred_check
          %p307 = pneg %p50
        $region22: #{tpu_custom_call.1} parent=19 // pred_check_branch
          %309 = sbr.rel (%p307) target = $region24
        $region23: #{tpu_custom_call.1} parent=19 // pred_region
          %p310 = scmp.lt.s32.totalorder %s25, 1
          %s311 = scalar_select %p310, %s25, 1
          %s312 = smul.addr %s311, 8
          %s313 = scalar_lea.vmem %s0, %s312
        $region24: #{tpu_custom_call.1} parent=19 // pred_fallthru
          _
        // Predicated region
        $region25: #{tpu_custom_call.1} parent=19 // pred_check
          %p314 = pneg %p76
        $region26: #{tpu_custom_call.1} parent=19 // pred_check_branch
          %316 = sbr.rel (%p314) target = $region28
        $region27: #{tpu_custom_call.1} parent=19 // pred_region
          %p317 = scmp.lt.s32.totalorder %s26, 3
          %s318 = scalar_select %p317, %s26, 3
          %s319 = smul.addr %s318, 4
          %s320 = smul.addr %s319, 8
          %s321 = scalar_lea.vmem %s1, %s320
        $region28: #{tpu_custom_call.1} parent=19 // pred_fallthru
          _
        // Predicated region
        $region29: #{tpu_custom_call.1} parent=19 // pred_check
          %p322 = pneg %p102
        $region30: #{tpu_custom_call.1} parent=19 // pred_check_branch
          %324 = sbr.rel (%p322) target = $region32
        $region31: #{tpu_custom_call.1} parent=19 // pred_region
          %p325 = scmp.lt.s32.totalorder %s26, 3
          %s326 = scalar_select %p325, %s26, 3
          %s327 = scalar_lea.vmem %s2, %s326
        $region32: #{tpu_custom_call.1} parent=19 // pred_fallthru
          _
        // Predicated region
        $region33: #{tpu_custom_call.1} parent=19 // pred_check
          %p328 = pneg %p128
        $region34: #{tpu_custom_call.1} parent=19 // pred_check_branch
          %330 = sbr.rel (%p328) target = $region36
        $region35: #{tpu_custom_call.1} parent=19 // pred_region
          %p331 = scmp.lt.s32.totalorder %s26, 3
          %s332 = scalar_select %p331, %s26, 3
          %s333 = smul.addr %s332, 4
          %s334 = smul.addr %s333, 8
          %s335 = scalar_lea.vmem %s3, %s334
        $region36: #{tpu_custom_call.1} parent=19 // pred_fallthru
          _
        // Predicated region
        $region37: #{tpu_custom_call.1} parent=19 // pred_check
          %p336 = pneg %p154
        $region38: #{tpu_custom_call.1} parent=19 // pred_check_branch
          %338 = sbr.rel (%p336) target = $region40
        $region39: #{tpu_custom_call.1} parent=19 // pred_region
          %p339 = scmp.lt.s32.totalorder %s26, 3
          %s340 = scalar_select %p339, %s26, 3
          %s341 = scalar_lea.vmem %s4, %s340
        $region40: #{tpu_custom_call.1} parent=19 // pred_fallthru
          _
        // Predicated region
        $region41: #{tpu_custom_call.1} parent=19 // pred_check
          %p342 = pneg %p180
        $region42: #{tpu_custom_call.1} parent=19 // pred_check_branch
          %344 = sbr.rel (%p342) target = $region44
        $region43: #{tpu_custom_call.1} parent=19 // pred_region
          %p345 = scmp.lt.s32.totalorder %s26, 3
          %s346 = scalar_select %p345, %s26, 3
          %s347 = smul.addr %s346, 4
          %s348 = smul.addr %s347, 8
          %s349 = scalar_lea.vmem %s5, %s348
        $region44: #{tpu_custom_call.1} parent=19 // pred_fallthru
          _
        // Predicated region
        $region45: #{tpu_custom_call.1} parent=19 // pred_check
          %p350 = pneg %p206
        $region46: #{tpu_custom_call.1} parent=19 // pred_check_branch
          %352 = sbr.rel (%p350) target = $region48
        $region47: #{tpu_custom_call.1} parent=19 // pred_region
          %p353 = scmp.lt.s32.totalorder %s26, 3
          %s354 = scalar_select %p353, %s26, 3
          %s355 = scalar_lea.vmem %s6, %s354
        $region48: #{tpu_custom_call.1} parent=19 // pred_fallthru
          _
        // Predicated region
        $region49: #{tpu_custom_call.1} parent=19 // pred_check
          %p356 = pneg %p232
        $region50: #{tpu_custom_call.1} parent=19 // pred_check_branch
          %358 = sbr.rel (%p356) target = $region52
        $region51: #{tpu_custom_call.1} parent=19 // pred_region
          %p359 = scmp.lt.s32.totalorder %s26, 3
          %s360 = scalar_select %p359, %s26, 3
          %s361 = smul.addr %s360, 8
          %s362 = scalar_lea.vmem %s7, %s361
        $region52: #{tpu_custom_call.1} parent=19 // pred_fallthru
          _
      $region20: #{tpu_custom_call.1} parent=5 // pred_fallthru
        _
      %p363 = scmp.le.s32.totalorder 1, %s18
      %p364 = scmp.lt.s32.totalorder %s18, 9
      %p365 = pnand %p363, %p364
      %p366 = pneg %p365
      // Predicated region
      $region53: #{tpu_custom_call.1} parent=5 // pred_check
        _
      $region54: #{tpu_custom_call.1} parent=5 // pred_check_branch
        %368 = sbr.rel (%p365) target = $region56
      $region55: #{tpu_custom_call.1} parent=5 // pred_region
        %s369 = ssub.s32 %s18, 1
        %p370 = scmp.lt.s32.totalorder %s27, 1
        %s371 = scalar_select %p370, %s27, 1
        %s372 = smul.addr %s371, 8
        %s373 = scalar_lea.vmem %s0, %s372
        %p374 = pneg %p56
        %p375 = pneg %p53
        %p376 = scmp.lt.s32.totalorder %s28, 3
        %s377 = scalar_select %p376, %s28, 3
        %s378 = smul.addr %s377, 4
        %s379 = smul.addr %s378, 8
        %s380 = scalar_lea.vmem %s1, %s379
        %p381 = pneg %p82
        %p382 = pneg %p79
        %p383 = scmp.lt.s32.totalorder %s28, 3
        %s384 = scalar_select %p383, %s28, 3
        %s385 = scalar_lea.vmem %s2, %s384
        %p386 = pneg %p108
        %p387 = pneg %p105
        %p388 = scmp.lt.s32.totalorder %s28, 3
        %s389 = scalar_select %p388, %s28, 3
        %s390 = smul.addr %s389, 4
        %s391 = smul.addr %s390, 8
        %s392 = scalar_lea.vmem %s3, %s391
        %p393 = pneg %p134
        %p394 = pneg %p131
        %p395 = scmp.lt.s32.totalorder %s28, 3
        %s396 = scalar_select %p395, %s28, 3
        %s397 = scalar_lea.vmem %s4, %s396
        %p398 = pneg %p160
        %p399 = pneg %p157
        %p400 = scmp.lt.s32.totalorder %s28, 3
        %s401 = scalar_select %p400, %s28, 3
        %s402 = smul.addr %s401, 4
        %s403 = smul.addr %s402, 8
        %s404 = scalar_lea.vmem %s5, %s403
        %p405 = pneg %p186
        %p406 = pneg %p183
        %p407 = scmp.lt.s32.totalorder %s28, 3
        %s408 = scalar_select %p407, %s28, 3
        %s409 = scalar_lea.vmem %s6, %s408
        %p410 = pneg %p212
        %p411 = pneg %p209
        %p412 = scmp.lt.s32.totalorder %s28, 3
        %s413 = scalar_select %p412, %s28, 3
        %s414 = smul.addr %s413, 8
        %s415 = scalar_lea.vmem %s7, %s414
        %p416 = pneg %p238
        %p417 = pneg %p235
        %p418 = pneg %p259
        %p419 = pneg %p256
        %p420 = pneg %p285
        %p421 = pneg %p282
        %s422 = sand.u32 %s272, 1
        %s423 = scalar_lea.sflag [#allocation9], %s422
        %s424 = sand.u32 %s272, 1
        %s425 = smul.addr %s424, 8
        %s426 = scalar_lea.vmem [#allocation8], %s425
        %p427 = scmp.lt.s32.totalorder %s27, 1
        %s428 = scalar_select %p427, %s27, 1
        %s429 = smul.addr %s428, 8
        %s430 = scalar_lea.vmem %s0, %s429
        %p431 = scmp.lt.s32.totalorder %s28, 3
        %s432 = scalar_select %p431, %s28, 3
        %s433 = smul.addr %s432, 4
        %s434 = smul.addr %s433, 8
        %s435 = scalar_lea.vmem %s1, %s434
        %p436 = scmp.lt.s32.totalorder %s28, 3
        %s437 = scalar_select %p436, %s28, 3
        %s438 = scalar_lea.vmem %s2, %s437
        %p439 = scmp.lt.s32.totalorder %s28, 3
        %s440 = scalar_select %p439, %s28, 3
        %s441 = smul.addr %s440, 4
        %s442 = smul.addr %s441, 8
        %s443 = scalar_lea.vmem %s3, %s442
        %p444 = scmp.lt.s32.totalorder %s28, 3
        %s445 = scalar_select %p444, %s28, 3
        %s446 = scalar_lea.vmem %s4, %s445
        %p447 = scmp.lt.s32.totalorder %s28, 3
        %s448 = scalar_select %p447, %s28, 3
        %s449 = smul.addr %s448, 4
        %s450 = smul.addr %s449, 8
        %s451 = scalar_lea.vmem %s5, %s450
        %p452 = scmp.lt.s32.totalorder %s28, 3
        %s453 = scalar_select %p452, %s28, 3
        %s454 = scalar_lea.vmem %s6, %s453
        %p455 = scmp.lt.s32.totalorder %s28, 3
        %s456 = scalar_select %p455, %s28, 3
        %s457 = smul.addr %s456, 8
        %s458 = scalar_lea.vmem %s7, %s457
        %v459 = vld [vmem:[%s430] sm:$0xff]
        %v460 = vld [vmem:[%s435] sm:$0xff]
        %v461 = vld [vmem:[%s435 + $0x8] sm:$0xff]
        %v462 = vld [vmem:[%s435 + $0x10] sm:$0xff]
        %v463 = vld [vmem:[%s435 + $0x18] sm:$0xff]
        %v464 = vld [vmem:[%s438] sm:$0x1]
        %v466 = vlaneseq
        %v467 = vshrl.u32 %v466, 7
        %v468 = vsub.s32 0, %v467
        %v469 = vrot.slane %v464, %v468
        %vm471 = vcmask 261120
        %v473 = vsel %vm471, %v459, 0
        %475 = vmatprep.subr.mxu0 0.0
        %476 = vmatpush1.msra.mxu0 0.0
        %477 = vmatprep.subr.mxu0 0.0
        %478 = vmatpush1.msra.mxu0 0.0
        %479 = vmatprep.subr.mxu0 0.0
        %480 = vmatpush1.msra.mxu0 0.0
        %481 = vmatprep.subr.mxu0 0.0
        %482 = vmatpush1.msra.mxu0 0.0
        %483 = vmatprep.subr.mxu0 0.0
        %484 = vmatpush1.msra.mxu0 0.0
        %485 = vmatprep.subr.mxu0 0.0
        %486 = vmatpush1.msra.mxu0 0.0
        %487 = vmatprep.subr.mxu0 0.0
        %488 = vmatpush1.msra.mxu0 0.0
        %489 = vmatprep.subr.mxu0 0.0
        %490 = vmatpush1.msra.mxu0 0.0
        %491 = vmatprep.subr.mxu0 0.0
        %492 = vmatpush1.msra.mxu0 0.0
        %493 = vmatprep.subr.mxu0 0.0
        %494 = vmatpush1.msra.mxu0 0.0
        %495 = vmatprep.subr.mxu0 0.0
        %496 = vmatpush1.msra.mxu0 0.0
        %497 = vmatprep.subr.mxu0 0.0
        %498 = vmatpush1.msra.mxu0 0.0
        %499 = vmatprep.subr.mxu0 0.0
        %500 = vmatpush1.msra.mxu0 %v463
        %501 = vmatprep.subr.mxu0 0.0
        %502 = vmatpush1.msra.mxu0 %v462
        %503 = vmatprep.subr.mxu0 0.0
        %504 = vmatpush1.msra.mxu0 %v461
        %505 = vmatprep.subr.mxu0 0.0
        %506 = vmatpush1.msra.mxu0 %v460
        %507 = vmatprep.subr.mxu0 0.0
        %508 = vmatpush2.msra.mxu0 0.0
        %509 = vmatprep.subr.mxu0 0.0
        %510 = vmatpush2.msra.mxu0 0.0
        %511 = vmatprep.subr.mxu0 0.0
        %512 = vmatpush2.msra.mxu0 0.0
        %513 = vmatprep.subr.mxu0 0.0
        %514 = vmatpush2.msra.mxu0 0.0
        %515 = vmatprep.subr.mxu0 0.0
        %516 = vmatpush2.msra.mxu0 0.0
        %517 = vmatprep.subr.mxu0 0.0
        %518 = vmatpush2.msra.mxu0 0.0
        %519 = vmatprep.subr.mxu0 0.0
        %520 = vmatpush2.msra.mxu0 0.0
        %521 = vmatprep.subr.mxu0 0.0
        %522 = vmatpush2.msra.mxu0 0.0
        %523 = vmatprep.subr.mxu0 0.0
        %524 = vmatpush2.msra.mxu0 0.0
        %525 = vmatprep.subr.mxu0 0.0
        %526 = vmatpush2.msra.mxu0 0.0
        %527 = vmatprep.subr.mxu0 0.0
        %528 = vmatpush2.msra.mxu0 0.0
        %529 = vmatprep.subr.mxu0 0.0
        %530 = vmatpush2.msra.mxu0 0.0
        %531 = vmatprep.subr.mxu0 0.0
        %532 = vmatpush2.msra.mxu0 0.0
        %533 = vmatprep.subr.mxu0 0.0
        %534 = vmatpush2.msra.mxu0 0.0
        %535 = vmatprep.subr.mxu0 0.0
        %536 = vmatpush2.msra.mxu0 0.0
        %537 = vmatprep.subr.mxu0 0.0
        %538 = vmatpush2.msra.mxu0 0.0
        %539 = vmatprep.mubr.f32.mxu0 0.0
        %540 = vmatmul.mubr.f32.gmra.mxu0 %v473
        %v541 = vpop.f32.mrf.mxu0
        %v542 = vadd.f32 %v469, %v541
        %v543 = vpop.f32.mrf.mxu0
        %544 = vdwg.mxu0
        %v545 = vmul.f32 %v542, 0.35355338
        %v546 = vld [vmem:[%s443] sm:$0xff]
        %v547 = vld [vmem:[%s443 + $0x8] sm:$0xff]
        %v548 = vld [vmem:[%s443 + $0x10] sm:$0xff]
        %v549 = vld [vmem:[%s443 + $0x18] sm:$0xff]
        %v550 = vld [vmem:[%s446] sm:$0x1]
        %v552 = vlaneseq
        %v553 = vshrl.u32 %v552, 7
        %v554 = vsub.s32 0, %v553
        %v555 = vrot.slane %v550, %v554
        %557 = vmatprep.subr.mxu0 0.0
        %558 = vmatpush1.msra.mxu0 0.0
        %559 = vmatprep.subr.mxu0 0.0
        %560 = vmatpush1.msra.mxu0 0.0
        %561 = vmatprep.subr.mxu0 0.0
        %562 = vmatpush1.msra.mxu0 0.0
        %563 = vmatprep.subr.mxu0 0.0
        %564 = vmatpush1.msra.mxu0 0.0
        %565 = vmatprep.subr.mxu0 0.0
        %566 = vmatpush1.msra.mxu0 0.0
        %567 = vmatprep.subr.mxu0 0.0
        %568 = vmatpush1.msra.mxu0 0.0
        %569 = vmatprep.subr.mxu0 0.0
        %570 = vmatpush1.msra.mxu0 0.0
        %571 = vmatprep.subr.mxu0 0.0
        %572 = vmatpush1.msra.mxu0 0.0
        %573 = vmatprep.subr.mxu0 0.0
        %574 = vmatpush1.msra.mxu0 0.0
        %575 = vmatprep.subr.mxu0 0.0
        %576 = vmatpush1.msra.mxu0 0.0
        %577 = vmatprep.subr.mxu0 0.0
        %578 = vmatpush1.msra.mxu0 0.0
        %579 = vmatprep.subr.mxu0 0.0
        %580 = vmatpush1.msra.mxu0 0.0
        %581 = vmatprep.subr.mxu0 0.0
        %582 = vmatpush1.msra.mxu0 %v549
        %583 = vmatprep.subr.mxu0 0.0
        %584 = vmatpush1.msra.mxu0 %v548
        %585 = vmatprep.subr.mxu0 0.0
        %586 = vmatpush1.msra.mxu0 %v547
        %587 = vmatprep.subr.mxu0 0.0
        %588 = vmatpush1.msra.mxu0 %v546
        %589 = vmatprep.subr.mxu0 0.0
        %590 = vmatpush2.msra.mxu0 0.0
        %591 = vmatprep.subr.mxu0 0.0
        %592 = vmatpush2.msra.mxu0 0.0
        %593 = vmatprep.subr.mxu0 0.0
        %594 = vmatpush2.msra.mxu0 0.0
        %595 = vmatprep.subr.mxu0 0.0
        %596 = vmatpush2.msra.mxu0 0.0
        %597 = vmatprep.subr.mxu0 0.0
        %598 = vmatpush2.msra.mxu0 0.0
        %599 = vmatprep.subr.mxu0 0.0
        %600 = vmatpush2.msra.mxu0 0.0
        %601 = vmatprep.subr.mxu0 0.0
        %602 = vmatpush2.msra.mxu0 0.0
        %603 = vmatprep.subr.mxu0 0.0
        %604 = vmatpush2.msra.mxu0 0.0
        %605 = vmatprep.subr.mxu0 0.0
        %606 = vmatpush2.msra.mxu0 0.0
        %607 = vmatprep.subr.mxu0 0.0
        %608 = vmatpush2.msra.mxu0 0.0
        %609 = vmatprep.subr.mxu0 0.0
        %610 = vmatpush2.msra.mxu0 0.0
        %611 = vmatprep.subr.mxu0 0.0
        %612 = vmatpush2.msra.mxu0 0.0
        %613 = vmatprep.subr.mxu0 0.0
        %614 = vmatpush2.msra.mxu0 0.0
        %615 = vmatprep.subr.mxu0 0.0
        %616 = vmatpush2.msra.mxu0 0.0
        %617 = vmatprep.subr.mxu0 0.0
        %618 = vmatpush2.msra.mxu0 0.0
        %619 = vmatprep.subr.mxu0 0.0
        %620 = vmatpush2.msra.mxu0 0.0
        %621 = vmatprep.mubr.f32.mxu0 0.0
        %622 = vmatmul.mubr.f32.gmra.mxu0 %v473
        %v623 = vpop.f32.mrf.mxu0
        %v624 = vadd.f32 %v555, %v623
        %v625 = vpop.f32.mrf.mxu0
        %626 = vdwg.mxu0
        %v627 = vld [vmem:[%s451] sm:$0xff]
        %v628 = vld [vmem:[%s451 + $0x8] sm:$0xff]
        %v629 = vld [vmem:[%s451 + $0x10] sm:$0xff]
        %v630 = vld [vmem:[%s451 + $0x18] sm:$0xff]
        %v631 = vld [vmem:[%s454] sm:$0x1]
        %v633 = vlaneseq
        %v634 = vshrl.u32 %v633, 7
        %v635 = vsub.s32 0, %v634
        %v636 = vrot.slane %v631, %v635
        %638 = vmatprep.subr.mxu0 0.0
        %639 = vmatpush1.msra.mxu0 0.0
        %640 = vmatprep.subr.mxu0 0.0
        %641 = vmatpush1.msra.mxu0 0.0
        %642 = vmatprep.subr.mxu0 0.0
        %643 = vmatpush1.msra.mxu0 0.0
        %644 = vmatprep.subr.mxu0 0.0
        %645 = vmatpush1.msra.mxu0 0.0
        %646 = vmatprep.subr.mxu0 0.0
        %647 = vmatpush1.msra.mxu0 0.0
        %648 = vmatprep.subr.mxu0 0.0
        %649 = vmatpush1.msra.mxu0 0.0
        %650 = vmatprep.subr.mxu0 0.0
        %651 = vmatpush1.msra.mxu0 0.0
        %652 = vmatprep.subr.mxu0 0.0
        %653 = vmatpush1.msra.mxu0 0.0
        %654 = vmatprep.subr.mxu0 0.0
        %655 = vmatpush1.msra.mxu0 0.0
        %656 = vmatprep.subr.mxu0 0.0
        %657 = vmatpush1.msra.mxu0 0.0
        %658 = vmatprep.subr.mxu0 0.0
        %659 = vmatpush1.msra.mxu0 0.0
        %660 = vmatprep.subr.mxu0 0.0
        %661 = vmatpush1.msra.mxu0 0.0
        %662 = vmatprep.subr.mxu0 0.0
        %663 = vmatpush1.msra.mxu0 %v630
        %664 = vmatprep.subr.mxu0 0.0
        %665 = vmatpush1.msra.mxu0 %v629
        %666 = vmatprep.subr.mxu0 0.0
        %667 = vmatpush1.msra.mxu0 %v628
        %668 = vmatprep.subr.mxu0 0.0
        %669 = vmatpush1.msra.mxu0 %v627
        %670 = vmatprep.subr.mxu0 0.0
        %671 = vmatpush2.msra.mxu0 0.0
        %672 = vmatprep.subr.mxu0 0.0
        %673 = vmatpush2.msra.mxu0 0.0
        %674 = vmatprep.subr.mxu0 0.0
        %675 = vmatpush2.msra.mxu0 0.0
        %676 = vmatprep.subr.mxu0 0.0
        %677 = vmatpush2.msra.mxu0 0.0
        %678 = vmatprep.subr.mxu0 0.0
        %679 = vmatpush2.msra.mxu0 0.0
        %680 = vmatprep.subr.mxu0 0.0
        %681 = vmatpush2.msra.mxu0 0.0
        %682 = vmatprep.subr.mxu0 0.0
        %683 = vmatpush2.msra.mxu0 0.0
        %684 = vmatprep.subr.mxu0 0.0
        %685 = vmatpush2.msra.mxu0 0.0
        %686 = vmatprep.subr.mxu0 0.0
        %687 = vmatpush2.msra.mxu0 0.0
        %688 = vmatprep.subr.mxu0 0.0
        %689 = vmatpush2.msra.mxu0 0.0
        %690 = vmatprep.subr.mxu0 0.0
        %691 = vmatpush2.msra.mxu0 0.0
        %692 = vmatprep.subr.mxu0 0.0
        %693 = vmatpush2.msra.mxu0 0.0
        %694 = vmatprep.subr.mxu0 0.0
        %695 = vmatpush2.msra.mxu0 0.0
        %696 = vmatprep.subr.mxu0 0.0
        %697 = vmatpush2.msra.mxu0 0.0
        %698 = vmatprep.subr.mxu0 0.0
        %699 = vmatpush2.msra.mxu0 0.0
        %700 = vmatprep.subr.mxu0 0.0
        %701 = vmatpush2.msra.mxu0 0.0
        %702 = vmatprep.mubr.f32.mxu0 0.0
        %703 = vmatmul.mubr.f32.gmra.mxu0 %v473
        %v704 = vpop.f32.mrf.mxu0
        %v705 = vadd.f32 %v636, %v704
        %v706 = vpop.f32.mrf.mxu0
        %707 = vdwg.mxu0
        %vm708 = vcmask 64512
        %709 = vst.msk [vmem:[#allocation2] sm:$0xff] %vm708, %v624
        %710 = vst.msk [vmem:[#allocation3] sm:$0xff] %vm708, %v705
        %vm711 = vcmask 7168
        %712 = vst.msk [vmem:[#allocation5] sm:$0xff] %vm711, -inf
        %713 = vst.msk [vmem:[#allocation6] sm:$0xff] %vm711, 0.0
        %714 = vst.msk [vmem:[#allocation4] sm:$0xff] %vm708, 0.0
        %v715 = vld [vmem:[#allocation2] sm:$0xff]
        %v716 = vld [vmem:[#allocation3] sm:$0xff]
        %v718 = vsel %vm708, %v545, 0
        %v721 = vsel %vm708, %v715, 0
        %723 = vmatprep.subr.mxu0 0.0
        %724 = vmatpush1.xpose.msra.mxu0 0.0
        %725 = vmatprep.subr.mxu0 0.0
        %726 = vmatpush1.xpose.msra.mxu0 0.0
        %727 = vmatprep.subr.mxu0 0.0
        %728 = vmatpush1.xpose.msra.mxu0 0.0
        %729 = vmatprep.subr.mxu0 0.0
        %730 = vmatpush1.xpose.msra.mxu0 0.0
        %731 = vmatprep.subr.mxu0 0.0
        %732 = vmatpush1.xpose.msra.mxu0 0.0
        %733 = vmatprep.subr.mxu0 0.0
        %734 = vmatpush1.xpose.msra.mxu0 0.0
        %735 = vmatprep.subr.mxu0 0.0
        %736 = vmatpush1.xpose.msra.mxu0 0.0
        %737 = vmatprep.subr.mxu0 0.0
        %738 = vmatpush1.xpose.msra.mxu0 0.0
        %739 = vmatprep.subr.mxu0 0.0
        %740 = vmatpush1.xpose.msra.mxu0 0.0
        %741 = vmatprep.subr.mxu0 0.0
        %742 = vmatpush1.xpose.msra.mxu0 0.0
        %743 = vmatprep.subr.mxu0 0.0
        %744 = vmatpush1.xpose.msra.mxu0 0.0
        %745 = vmatprep.subr.mxu0 0.0
        %746 = vmatpush1.xpose.msra.mxu0 0.0
        %747 = vmatprep.subr.mxu0 0.0
        %748 = vmatpush1.xpose.msra.mxu0 0.0
        %749 = vmatprep.subr.mxu0 0.0
        %750 = vmatpush1.xpose.msra.mxu0 0.0
        %751 = vmatprep.subr.mxu0 0.0
        %752 = vmatpush1.xpose.msra.mxu0 0.0
        %753 = vmatprep.subr.mxu0 0.0
        %754 = vmatpush1.xpose.msra.mxu0 %v721
        %755 = vmatprep.subr.mxu0 0.0
        %756 = vmatpush2.xpose.msra.mxu0 0.0
        %757 = vmatprep.subr.mxu0 0.0
        %758 = vmatpush2.xpose.msra.mxu0 0.0
        %759 = vmatprep.subr.mxu0 0.0
        %760 = vmatpush2.xpose.msra.mxu0 0.0
        %761 = vmatprep.subr.mxu0 0.0
        %762 = vmatpush2.xpose.msra.mxu0 0.0
        %763 = vmatprep.subr.mxu0 0.0
        %764 = vmatpush2.xpose.msra.mxu0 0.0
        %765 = vmatprep.subr.mxu0 0.0
        %766 = vmatpush2.xpose.msra.mxu0 0.0
        %767 = vmatprep.subr.mxu0 0.0
        %768 = vmatpush2.xpose.msra.mxu0 0.0
        %769 = vmatprep.subr.mxu0 0.0
        %770 = vmatpush2.xpose.msra.mxu0 0.0
        %771 = vmatprep.subr.mxu0 0.0
        %772 = vmatpush2.xpose.msra.mxu0 0.0
        %773 = vmatprep.subr.mxu0 0.0
        %774 = vmatpush2.xpose.msra.mxu0 0.0
        %775 = vmatprep.subr.mxu0 0.0
        %776 = vmatpush2.xpose.msra.mxu0 0.0
        %777 = vmatprep.subr.mxu0 0.0
        %778 = vmatpush2.xpose.msra.mxu0 0.0
        %779 = vmatprep.subr.mxu0 0.0
        %780 = vmatpush2.xpose.msra.mxu0 0.0
        %781 = vmatprep.subr.mxu0 0.0
        %782 = vmatpush2.xpose.msra.mxu0 0.0
        %783 = vmatprep.subr.mxu0 0.0
        %784 = vmatpush2.xpose.msra.mxu0 0.0
        %785 = vmatprep.subr.mxu0 0.0
        %786 = vmatpush2.xpose.msra.mxu0 0.0
        %787 = vmatprep.mubr.f32.mxu0 0.0
        %788 = vmatmul.mubr.f32.gmra.mxu0 %v718
        %v789 = vpop.f32.mrf.mxu0
        %v790 = vadd.f32 0.0, %v789
        %v791 = vpop.f32.mrf.mxu0
        %792 = vdwg.mxu0
        %v793 = vld [vmem:[#allocation5] sm:$0xff]
        %v794 = vsel %vm708, %v790, -inf
        %795 = vmax.xlane.f32.xlu0 %v794
        %v796 = vpop.xlane.xlu0 %795
        %v797 = vmax.f32 %v793, %v796
        %v798 = vsub.f32 %v793, %v797
        %v799 = vmul.f32 %v798, 1.442695
        %v800 = vpow.pop %v799
        %802 = vset.pattern.permute.xlu0 0
        %803 = vperm.xlu0 %802, %v797
        %v804 = vpop.permute.xlu0 %803
        %v806 = vsub.f32 %v790, %v804
        %v807 = vmul.f32 %v806, 1.442695
        %v808 = vpow.pop %v807
        %v809 = vld [vmem:[#allocation6] sm:$0xff]
        %v810 = vmul.f32 %v800, %v809
        %v811 = vsel %vm708, %v808, 0.0
        %812 = vadd.xlane.f32.xlu0 %v811
        %v813 = vpop.xlane.xlu0 %812
        %v814 = vadd.f32 %v810, %v813
        %815 = vst.msk [vmem:[#allocation6] sm:$0xff] %vm711, %v814
        %v816 = vld [vmem:[#allocation4] sm:$0xff]
        %818 = vset.pattern.permute.xlu0 0
        %819 = vperm.xlu0 %818, %v800
        %v820 = vpop.permute.xlu0 %819
        %v822 = vmul.f32 %v820, %v816
        %v824 = vsel %vm708, %v808, 0
        %826 = vmatprep.subr.mxu0 0.0
        %827 = vmatpush1.msra.mxu0 0.0
        %828 = vmatprep.subr.mxu0 0.0
        %829 = vmatpush1.msra.mxu0 0.0
        %830 = vmatprep.subr.mxu0 0.0
        %831 = vmatpush1.msra.mxu0 0.0
        %832 = vmatprep.subr.mxu0 0.0
        %833 = vmatpush1.msra.mxu0 0.0
        %834 = vmatprep.subr.mxu0 0.0
        %835 = vmatpush1.msra.mxu0 0.0
        %836 = vmatprep.subr.mxu0 0.0
        %837 = vmatpush1.msra.mxu0 0.0
        %838 = vmatprep.subr.mxu0 0.0
        %839 = vmatpush1.msra.mxu0 0.0
        %840 = vmatprep.subr.mxu0 0.0
        %841 = vmatpush1.msra.mxu0 0.0
        %842 = vmatprep.subr.mxu0 0.0
        %843 = vmatpush1.msra.mxu0 0.0
        %844 = vmatprep.subr.mxu0 0.0
        %845 = vmatpush1.msra.mxu0 0.0
        %846 = vmatprep.subr.mxu0 0.0
        %847 = vmatpush1.msra.mxu0 0.0
        %848 = vmatprep.subr.mxu0 0.0
        %849 = vmatpush1.msra.mxu0 0.0
        %850 = vmatprep.subr.mxu0 0.0
        %851 = vmatpush1.msra.mxu0 0.0
        %852 = vmatprep.subr.mxu0 0.0
        %853 = vmatpush1.msra.mxu0 0.0
        %854 = vmatprep.subr.mxu0 0.0
        %855 = vmatpush1.msra.mxu0 0.0
        %856 = vmatprep.subr.mxu0 0.0
        %857 = vmatpush1.msra.mxu0 %v716
        %858 = vmatprep.subr.mxu0 0.0
        %859 = vmatpush2.msra.mxu0 0.0
        %860 = vmatprep.subr.mxu0 0.0
        %861 = vmatpush2.msra.mxu0 0.0
        %862 = vmatprep.subr.mxu0 0.0
        %863 = vmatpush2.msra.mxu0 0.0
        %864 = vmatprep.subr.mxu0 0.0
        %865 = vmatpush2.msra.mxu0 0.0
        %866 = vmatprep.subr.mxu0 0.0
        %867 = vmatpush2.msra.mxu0 0.0
        %868 = vmatprep.subr.mxu0 0.0
        %869 = vmatpush2.msra.mxu0 0.0
        %870 = vmatprep.subr.mxu0 0.0
        %871 = vmatpush2.msra.mxu0 0.0
        %872 = vmatprep.subr.mxu0 0.0
        %873 = vmatpush2.msra.mxu0 0.0
        %874 = vmatprep.subr.mxu0 0.0
        %875 = vmatpush2.msra.mxu0 0.0
        %876 = vmatprep.subr.mxu0 0.0
        %877 = vmatpush2.msra.mxu0 0.0
        %878 = vmatprep.subr.mxu0 0.0
        %879 = vmatpush2.msra.mxu0 0.0
        %880 = vmatprep.subr.mxu0 0.0
        %881 = vmatpush2.msra.mxu0 0.0
        %882 = vmatprep.subr.mxu0 0.0
        %883 = vmatpush2.msra.mxu0 0.0
        %884 = vmatprep.subr.mxu0 0.0
        %885 = vmatpush2.msra.mxu0 0.0
        %886 = vmatprep.subr.mxu0 0.0
        %887 = vmatpush2.msra.mxu0 0.0
        %888 = vmatprep.subr.mxu0 0.0
        %889 = vmatpush2.msra.mxu0 0.0
        %890 = vmatprep.mubr.f32.mxu0 0.0
        %891 = vmatmul.mubr.f32.gmra.mxu0 %v824
        %v892 = vpop.f32.mrf.mxu0
        %v893 = vadd.f32 0.0, %v892
        %v894 = vpop.f32.mrf.mxu0
        %895 = vdwg.mxu0
        %v896 = vadd.f32 %v822, %v893
        %897 = vst.msk [vmem:[#allocation4] sm:$0xff] %vm708, %v896
        %898 = vst.msk [vmem:[#allocation5] sm:$0xff] %vm711, %v797
        %v899 = vld [vmem:[#allocation4] sm:$0xff]
        %v900 = vld [vmem:[#allocation6] sm:$0xff]
        %902 = vset.pattern.permute.xlu0 0
        %903 = vperm.xlu0 %902, %v900
        %v904 = vpop.permute.xlu0 %903
        %v906 = vrcp.pop %v904
        %v907 = vmul.f32 %v899, %v906
        %v908 = vld [vmem:[%s458] sm:$0xff]
        %v910 = vsel %vm708, %v907, 0
        %912 = vmatprep.subr.mxu0 0.0
        %913 = vmatpush1.msra.mxu0 0.0
        %914 = vmatprep.subr.mxu0 0.0
        %915 = vmatpush1.msra.mxu0 0.0
        %916 = vmatprep.subr.mxu0 0.0
        %917 = vmatpush1.msra.mxu0 0.0
        %918 = vmatprep.subr.mxu0 0.0
        %919 = vmatpush1.msra.mxu0 0.0
        %920 = vmatprep.subr.mxu0 0.0
        %921 = vmatpush1.msra.mxu0 0.0
        %922 = vmatprep.subr.mxu0 0.0
        %923 = vmatpush1.msra.mxu0 0.0
        %924 = vmatprep.subr.mxu0 0.0
        %925 = vmatpush1.msra.mxu0 0.0
        %926 = vmatprep.subr.mxu0 0.0
        %927 = vmatpush1.msra.mxu0 0.0
        %928 = vmatprep.subr.mxu0 0.0
        %929 = vmatpush1.msra.mxu0 0.0
        %930 = vmatprep.subr.mxu0 0.0
        %931 = vmatpush1.msra.mxu0 0.0
        %932 = vmatprep.subr.mxu0 0.0
        %933 = vmatpush1.msra.mxu0 0.0
        %934 = vmatprep.subr.mxu0 0.0
        %935 = vmatpush1.msra.mxu0 0.0
        %936 = vmatprep.subr.mxu0 0.0
        %937 = vmatpush1.msra.mxu0 0.0
        %938 = vmatprep.subr.mxu0 0.0
        %939 = vmatpush1.msra.mxu0 0.0
        %940 = vmatprep.subr.mxu0 0.0
        %941 = vmatpush1.msra.mxu0 0.0
        %942 = vmatprep.subr.mxu0 0.0
        %943 = vmatpush1.msra.mxu0 %v908
        %944 = vmatprep.subr.mxu0 0.0
        %945 = vmatpush2.msra.mxu0 0.0
        %946 = vmatprep.subr.mxu0 0.0
        %947 = vmatpush2.msra.mxu0 0.0
        %948 = vmatprep.subr.mxu0 0.0
        %949 = vmatpush2.msra.mxu0 0.0
        %950 = vmatprep.subr.mxu0 0.0
        %951 = vmatpush2.msra.mxu0 0.0
        %952 = vmatprep.subr.mxu0 0.0
        %953 = vmatpush2.msra.mxu0 0.0
        %954 = vmatprep.subr.mxu0 0.0
        %955 = vmatpush2.msra.mxu0 0.0
        %956 = vmatprep.subr.mxu0 0.0
        %957 = vmatpush2.msra.mxu0 0.0
        %958 = vmatprep.subr.mxu0 0.0
        %959 = vmatpush2.msra.mxu0 0.0
        %960 = vmatprep.subr.mxu0 0.0
        %961 = vmatpush2.msra.mxu0 0.0
        %962 = vmatprep.subr.mxu0 0.0
        %963 = vmatpush2.msra.mxu0 0.0
        %964 = vmatprep.subr.mxu0 0.0
        %965 = vmatpush2.msra.mxu0 0.0
        %966 = vmatprep.subr.mxu0 0.0
        %967 = vmatpush2.msra.mxu0 0.0
        %968 = vmatprep.subr.mxu0 0.0
        %969 = vmatpush2.msra.mxu0 0.0
        %970 = vmatprep.subr.mxu0 0.0
        %971 = vmatpush2.msra.mxu0 0.0
        %972 = vmatprep.subr.mxu0 0.0
        %973 = vmatpush2.msra.mxu0 0.0
        %974 = vmatprep.subr.mxu0 0.0
        %975 = vmatpush2.msra.mxu0 0.0
        %976 = vmatprep.mubr.f32.mxu0 0.0
        %977 = vmatmul.mubr.f32.gmra.mxu0 %v910
        %v978 = vpop.f32.mrf.mxu0
        %v979 = vadd.f32 0.0, %v978
        %v980 = vpop.f32.mrf.mxu0
        %981 = vdwg.mxu0
        %p982 = scmp.eq.s32.totalorder %s28, 0
        // Predicated region
        $region57: #{tpu_custom_call.1} parent=55 // pred_check
          %p983 = pneg %p982
        $region58: #{tpu_custom_call.1} parent=55 // pred_check_branch
          %985 = sbr.rel (%p983) target = $region60
        $region59: #{tpu_custom_call.1} parent=55 // pred_region
          %986 = vst.msk [vmem:[#allocation7] sm:$0xff] %vm471, 0.0
        $region60: #{tpu_custom_call.1} parent=55 // pred_fallthru
          _
        %v987 = vld [vmem:[#allocation7] sm:$0xff]
        %v988 = vadd.f32 %v987, %v979
        %989 = vst.msk [vmem:[#allocation7] sm:$0xff] %vm471, %v988
        %p990 = scmp.eq.s32.totalorder %s28, 3
        // Predicated region
        $region61: #{tpu_custom_call.1} parent=55 // pred_check
          %p991 = pneg %p990
        $region62: #{tpu_custom_call.1} parent=55 // pred_check_branch
          %993 = sbr.rel (%p991) target = $region64
        $region63: #{tpu_custom_call.1} parent=55 // pred_region
          %v994 = vld [vmem:[#allocation7] sm:$0xff]
          %v995 = vld [vmem:[%s8] sm:$0x1]
          %v997 = vlaneseq
          %v998 = vshrl.u32 %v997, 7
          %v999 = vsub.s32 0, %v998
          %v1000 = vrot.slane %v995, %v999
          %v1002 = vadd.f32 %v994, %v1000
          %1003 = vst.msk [vmem:[%s426] sm:$0xff] %vm471, %v1002
        $region64: #{tpu_custom_call.1} parent=55 // pred_fallthru
          _
        %s1004 = sand.u32 %s272, 1
        %s1005 = scalar_lea.sflag [#allocation9], %s1004
        %s1006 = sand.u32 %s272, 1
        %s1007 = smul.addr %s1006, 8
        %s1008 = scalar_lea.vmem [#allocation8], %s1007
        // Predicated region
        $region65: #{tpu_custom_call.1} parent=55 // pred_check
          %p1009 = pneg %p282
        $region66: #{tpu_custom_call.1} parent=55 // pred_check_branch
          %1011 = sbr.rel (%p1009) target = $region68
        $region67: #{tpu_custom_call.1} parent=55 // pred_region
          %s1013 = ssub.s32 128, 128
          %1014 = vsyncadd %s1005, %s1013
          %s1015 = smul.addr %s27, 128
          %s1016 = scalar_lea.hbm %s9, %s1015
          %s1018 = sshll.u32 %s1008, 4
          %s1019 = int_to_ptr.vmem [resolvable:$true] %s1018
          %1021 = dma.vmem_to_hbm [thread:$0]  %s1019, 128, %s1016, %s1005
        $region68: #{tpu_custom_call.1} parent=55 // pred_fallthru
          _
      $region56: #{tpu_custom_call.1} parent=5 // pred_fallthru
        _
      %p1022 = scmp.le.s32.totalorder 2, %s18
      // Predicated region
      $region69: #{tpu_custom_call.1} parent=5 // pred_check
        %p1023 = pneg %p1022
      $region70: #{tpu_custom_call.1} parent=5 // pred_check_branch
        %1025 = sbr.rel (%p1023) target = $region72
      $region71: #{tpu_custom_call.1} parent=5 // pred_region
        %s1026 = ssub.s32 %s18, 2
        // Predicated region
        $region73: #{tpu_custom_call.1} parent=71 // pred_check
          %p1027 = pneg %p288
        $region74: #{tpu_custom_call.1} parent=71 // pred_check_branch
          %1029 = sbr.rel (%p1027) target = $region76
        $region75: #{tpu_custom_call.1} parent=71 // pred_region
          %s1030 = sand.u32 %s273, 1
          %s1031 = scalar_lea.sflag [#allocation9], %s1030
          %s1032 = sand.u32 %s273, 1
          %s1033 = smul.addr %s1032, 8
          %s1034 = scalar_lea.vmem [#allocation8], %s1033
          %1035 = dma.done %s1031, 128
        $region76: #{tpu_custom_call.1} parent=71 // pred_fallthru
          _
      $region72: #{tpu_custom_call.1} parent=5 // pred_fallthru
        _
    $region6: #{tpu_custom_call.1} parent=1 // loop_footer
      %s22 = sadd.s32 1, %s18
    $region7: #{tpu_custom_call.1} parent=1 // loop_footer_branch
      %17 = sbr.rel target = $region3
    $region8: #{tpu_custom_call.1} parent=1 // loop_exit
      _
    %1036 = vsyncpa [#allocation9], 1
    %s1037 = scalar_lea.sflag [#allocation9], 1
    %1038 = vsyncpa %s1037, 1

</llo_original>
